<compile_context>
chip_gen: v7x
topology: tpu7x:2x2x1
jax: 0.10.0
libtpu: 0.0.40
codegen_flags: <defaults>
</compile_context>

<pallas_src>
import numpy as np
import jax
import jax.numpy as jnp
from jax import lax
from jax.experimental import pallas as pl
from jax.experimental.pallas import tpu as pltpu

# ----- Denoiser hyper-parameters (scaled down, lane-aligned) -----------------
FILTER_LENGTH = 512
N_OVERLAP = 4
HOP_LENGTH = FILTER_LENGTH // N_OVERLAP        # 128 (== TPU lane width)
WIN_LENGTH = FILTER_LENGTH
CUTOFF = FILTER_LENGTH // 2 + 1                # 257 bins
PACK_BINS = FILTER_LENGTH // 2                 # 256 lanes per packed half
SPEC_LANES = 2 * PACK_BINS                     # 512 spectrum lanes, none wasted
TINY_F32 = float(np.finfo(np.float32).tiny)


def _hann_periodic(n):
    k = np.arange(n)
    return 0.5 - 0.5 * np.cos(2.0 * np.pi * k / n)


def make_params(key):
    """Packed STFT bases (512 spectrum lanes, no zero padding) + synthetic bias."""
    F, C, P = FILTER_LENGTH, CUTOFF, PACK_BINS
    fourier = np.fft.fft(np.eye(F))
    fb = np.vstack([np.real(fourier[:C, :]), np.imag(fourier[:C, :])])      # (2C, F)
    win = _hann_periodic(WIN_LENGTH)
    forward_basis = fb * win[None, :]                                       # (2C, F)
    scale = FILTER_LENGTH / HOP_LENGTH
    inverse_basis = np.linalg.pinv(scale * fb).T * win[None, :]             # (2C, F)

    # Packed spectrum layout (2P == F lanes):
    #   lane k   (0..P-1):   real part of bin k
    #   lane P   :           real part of bin P (Nyquist; its imag is identically 0)
    #   lane P+k (k=1..P-1): imag part of bin k  (imag of bins 0 and P are identically 0)
    fwd = np.zeros((F, 2 * P), np.float32)
    fwd[:, :P] = forward_basis[:P].T
    fwd[:, P] = forward_basis[P]
    fwd[:, P + 1:] = forward_basis[C + 1:C + P].T
    inv = np.zeros((2 * P, F), np.float32)
    inv[:P] = inverse_basis[:P]
    inv[P] = inverse_basis[P]
    inv[P + 1:] = inverse_basis[C + 1:C + P]

    # bias_spec is (1, cutoff, 1) in torch; packed to (1, 2P) so every spectrum
    # lane sees its own bin's bias (imag lanes reuse the per-bin value).
    bias_c = np.abs(np.asarray(jax.random.normal(key, (1, C), jnp.float32))) * 0.5
    bias = np.zeros((1, 2 * P), np.float32)
    bias[0, :P] = bias_c[0, :P]
    bias[0, P] = bias_c[0, P]
    bias[0, P + 1:] = bias_c[0, 1:P]

    return {
        "fwd": jnp.asarray(fwd, jnp.bfloat16),    # bf16 MXU operands, f32 accumulate
        "inv": jnp.asarray(inv, jnp.bfloat16),
        "bias": jnp.asarray(bias, jnp.float32),
        # float64, unpacked copies for the numpy reference
        "fwd_f64": forward_basis.astype(np.float64),
        "inv_f64": inverse_basis.astype(np.float64),
        "bias_f64": bias_c.astype(np.float64),
    }


# --------------------------- Pallas kernel -----------------------------------
def denoiser_kernel(strength_ref, frames_ref, fwd_ref, inv_ref, bias_ref,
                    wcorr_ref, out_ref):
    # frames_ref: (rows, F) bf16       fwd_ref:  (F, 2P) bf16
    # inv_ref:    (2P, F) bf16         bias_ref: (1, 2P) f32
    # wcorr_ref:  (M_PAD, hop) f32     out_ref:  (bpt, M_PAD, hop) f32
    rows, flen = frames_ref.shape
    cp = bias_ref.shape[1] // 2                        # packed bins per half
    bpt, m_pad, hop = out_ref.shape
    nf_pad = rows // bpt                               # == m_pad by construction
    n_overlap = flen // hop
    strength = strength_ref[0]

    # forward STFT: one fused matmul against the packed [real | nyq,imag] basis.
    spec = jnp.dot(frames_ref[...], fwd_ref[...],
                   preferred_element_type=jnp.float32)             # (rows, 2P) f32

    # per-bin power in the packed layout: lanes k and P+k belong to the same
    # bin for k = 1..P-1; lane 0 (DC real) and lane P (Nyquist real) are
    # real-only bins and must not cross-add.
    p = spec * spec
    p_sw = jnp.concatenate([p[:, cp:], p[:, :cp]], axis=-1)         # swap halves
    lane = lax.broadcasted_iota(jnp.int32, (1, 2 * cp), 1)
    cross = jnp.logical_and(lane != 0, lane != cp)
    power = p + jnp.where(cross, p_sw, 0.0)

    # denoise: |S| - strength*bias, clamp at 0, recombine with the unit phase.
    # One EUP rsqrt; power == 0 lanes give mag = den = 0 (torch atan2(0,0) = 0).
    inv_mag = lax.rsqrt(power + TINY_F32)
    mag = power * inv_mag                                           # == sqrt(power)
    den = jnp.maximum(mag - bias_ref[...] * strength, 0.0)
    ri = (spec * (den * inv_mag)).astype(jnp.bfloat16)              # den/mag, safe at 0

    # inverse STFT per-frame contribution: one fused matmul.
    contrib = jnp.dot(ri, inv_ref[...],
                      preferred_element_type=jnp.float32)           # (rows, F) f32

    # overlap-add (conv_transpose1d) fully in registers; one aligned store per
    # batch.  Frame t's j-th hop chunk lands on output row t + j.
    wcorr = wcorr_ref[...]
    for bb in range(bpt):                                           # static, small
        c = contrib[bb * nf_pad:(bb + 1) * nf_pad]                  # aligned slice
        acc = c[:, :hop]                                            # j = 0 term
        for j in range(1, n_overlap):
            shifted = jnp.concatenate(
                [jnp.zeros((j, hop), jnp.float32),
                 c[:nf_pad - j, j * hop:(j + 1) * hop]], axis=0)
            acc = acc + shifted
        out_ref[bb] = acc * wcorr


# ----------------------------- wrapper ----------------------------------------
def denoiser_forward(audio, params, strength=0.1):
    B, T = audio.shape
    F, hop, pad = FILTER_LENGTH, HOP_LENGTH, FILTER_LENGTH // 2
    assert (T + 2 * pad) % hop == 0, "padded signal must be hop-aligned"

    # reflect pad + gather-free framing (host/XLA glue): each frame is the
    # concat of N_OVERLAP consecutive hop-blocks.
    padded = jnp.pad(audio, ((0, 0), (pad, pad)), mode="reflect")
    nblk = (T + 2 * pad) // hop
    nf = nblk - N_OVERLAP + 1
    blocks = padded.reshape(B, nblk, hop)
    frames = jnp.concatenate([blocks[:, j:j + nf] for j in range(N_OVERLAP)],
                             axis=-1)                                # (B, nf, F)

    # pad frame rows (== output rows) to a sublane multiple; appended zero
    # frames contribute exactly zero to the output.
    M = nf + N_OVERLAP - 1                                           # == nblk
    MP = -(-M // 8) * 8
    frames = jnp.pad(frames, ((0, 0), (0, MP - nf), (0, 0)))
    frames2d = frames.reshape(B * MP, F).astype(jnp.bfloat16)        # MXU row stack

    # window_sumsquare correction + filter_length/hop rescale, folded host-side
    # into a single multiplicative slab (rows >= M are never read back).
    win_sq = _hann_periodic(WIN_LENGTH).astype(np.float64) ** 2
    ws = np.zeros(M * hop, np.float64)
    for t in range(nf):
        ws[t * hop:t * hop + F] += win_sq
    fh = float(FILTER_LENGTH) / float(HOP_LENGTH)
    wcorr = np.zeros((MP, hop), np.float32)
    wcorr[:M] = np.where(ws > TINY_F32, fh / ws, fh).astype(np.float32).reshape(M, hop)

    # row tile = a whole number of batches, up to ~256 MXU rows per grid step.
    bpt = max(1, min(B, 256 // MP))
    while B % bpt:
        bpt -= 1
    rows_tile = bpt * MP
    grid = (B // bpt,)

    strength_arr = jnp.asarray([strength], jnp.float32)              # SMEM scalar

    cost = pl.CostEstimate(
        flops=4 * B * MP * F * SPEC_LANES,                           # two MXU passes
        transcendentals=B * MP * SPEC_LANES,                         # rsqrt
        bytes_accessed=(B * MP * F * 2 + B * MP * hop * 4
                        + (B // bpt) * (2 * F * SPEC_LANES * 2
                                        + SPEC_LANES * 4 + MP * hop * 4)))

    out = pl.pallas_call(
        denoiser_kernel,
        out_shape=jax.ShapeDtypeStruct((B, MP, hop), jnp.float32),
        grid=grid,
        in_specs=[
            pl.BlockSpec(memory_space=pltpu.MemorySpace.SMEM),        # strength
            pl.BlockSpec((rows_tile, F), lambda i: (i, 0)),           # frame rows
            pl.BlockSpec((F, SPEC_LANES), lambda i: (0, 0)),          # packed fwd basis
            pl.BlockSpec((SPEC_LANES, F), lambda i: (0, 0)),          # packed inv basis
            pl.BlockSpec((1, SPEC_LANES), lambda i: (0, 0)),          # packed bias spec
            pl.BlockSpec((MP, hop), lambda i: (0, 0)),                # window correction
        ],
        out_specs=pl.BlockSpec((bpt, MP, hop), lambda i: (i, 0, 0)),
        compiler_params=pltpu.CompilerParams(
            dimension_semantics=("parallel",),
            vmem_limit_bytes=32 * 1024 * 1024),
        cost_estimate=cost,
    )(strength_arr, frames2d, params["fwd"], params["inv"], params["bias"],
      jnp.asarray(wcorr))

    # hop == 128 lanes -> every kernel store was full-lane; flat view + trim.
    audio_full = out.reshape(B, MP * hop)
    audio_denoised = audio_full[:, pad:pad + T]                       # trim F/2 each side
    return audio_denoised[:, None, :]                                 # (B, 1, T) like torch


# ----------------------- numpy float64 reference ------------------------------
def reference_forward(audio, params, strength=0.1):
    a = np.asarray(audio, np.float64)
    C = CUTOFF
    fwd = params["fwd_f64"]                                          # (2C, F)
    inv = params["inv_f64"]                                          # (2C, F)
    bias = params["bias_f64"]                                        # (1, C)

    B, T = a.shape
    F, hop, pad = FILTER_LENGTH, HOP_LENGTH, FILTER_LENGTH // 2
    padded = np.pad(a, ((0, 0), (pad, pad)), mode="reflect")
    nf = (padded.shape[1] - F) // hop + 1
    idx = np.arange(nf)[:, None] * hop + np.arange(F)[None, :]
    frames = padded[:, idx]                                          # (B, nf, F)

    real = frames @ fwd[:C].T
    imag = frames @ fwd[C:].T
    mag = np.sqrt(real ** 2 + imag ** 2)
    phase = np.arctan2(imag, real)
    den = np.maximum(mag - bias[None] * strength, 0.0)
    re2 = den * np.cos(phase)
    im2 = den * np.sin(phase)
    contrib = re2 @ inv[:C] + im2 @ inv[C:]                          # (B, nf, F)

    L = (nf - 1) * hop + F
    out = np.zeros((B, L))
    for t in range(nf):
        out[:, t * hop:t * hop + F] += contrib[:, t]

    win_sq = _hann_periodic(WIN_LENGTH) ** 2
    ws = np.zeros(L)
    for t in range(nf):
        ws[t * hop:t * hop + F] += win_sq
    nz = ws > TINY_F32
    out[:, nz] /= ws[nz]
    out *= FILTER_LENGTH / HOP_LENGTH
    out = out[:, pad:L - pad]
    return out[:, None, :]


if __name__ == "__main__":
    key = jax.random.PRNGKey(0)
    k_bias, k_audio = jax.random.split(key)
    params = make_params(k_bias)

    B, T = 2, 2048
    audio = jax.random.normal(k_audio, (B, T), jnp.float32)

    out = denoiser_forward(audio, params, strength=0.1)
    out = jax.block_until_ready(out)

    ref = reference_forward(np.asarray(audio), params, strength=0.1)
    assert out.shape == (B, 1, T), out.shape
    assert np.isfinite(np.asarray(out)).all()
    max_err = float(np.max(np.abs(np.asarray(out, np.float64) - ref)))
    assert max_err < 1e-1, f"max abs err {max_err}"

    print("KERNEL_OK")
</pallas_src>

<mosaic_0001>
module attributes {stable_mosaic.version = 11 : i64} {
  func.func @denoiser_kernel(%arg0: i32, %arg1: memref<1xf32, #tpu.memory_space<smem>>, %arg2: memref<48x512xbf16, #tpu.memory_space<vmem>>, %arg3: memref<512x512xbf16, #tpu.memory_space<vmem>>, %arg4: memref<512x512xbf16, #tpu.memory_space<vmem>>, %arg5: memref<1x512xf32, #tpu.memory_space<vmem>>, %arg6: memref<24x128xf32, #tpu.memory_space<vmem>>, %arg7: memref<2x24x128xf32, #tpu.memory_space<vmem>>) attributes {dimension_semantics = [#tpu.dimension_semantics<parallel>], iteration_bounds = array<i64: 1>, scalar_prefetch = 0 : i64, scratch_operands = 0 : i64, tpu.core_type = #tpu.core_type<tc>, window_params = [{transform_indices = @transform_0, window_bounds = array<i64: 1>}, {transform_indices = @transform_1, window_bounds = array<i64: 48, 512>}, {pipeline_mode = #tpu.pipeline_mode<synchronous>, transform_indices = @transform_2, window_bounds = array<i64: 512, 512>}, {pipeline_mode = #tpu.pipeline_mode<synchronous>, transform_indices = @transform_3, window_bounds = array<i64: 512, 512>}, {pipeline_mode = #tpu.pipeline_mode<synchronous>, transform_indices = @transform_4, window_bounds = array<i64: 1, 512>}, {pipeline_mode = #tpu.pipeline_mode<synchronous>, transform_indices = @transform_5, window_bounds = array<i64: 24, 128>}, {transform_indices = @transform_6, window_bounds = array<i64: 2, 24, 128>}]} {
    %c0 = arith.constant 0 : index
    %0 = memref.load %arg1[%c0] : memref<1xf32, #tpu.memory_space<smem>>
    %c0_0 = arith.constant 0 : index
    %c0_1 = arith.constant 0 : index
    %1 = vector.load %arg2[%c0_0, %c0_1] : memref<48x512xbf16, #tpu.memory_space<vmem>>, vector<48x512xbf16>
    %c0_2 = arith.constant 0 : index
    %c0_3 = arith.constant 0 : index
    %2 = vector.load %arg3[%c0_2, %c0_3] : memref<512x512xbf16, #tpu.memory_space<vmem>>, vector<512x512xbf16>
    %cst = arith.constant dense<0.000000e+00> : vector<48x512xf32>
    %3 = tpu.matmul %1, %2, %cst {dimension_numbers = #tpu.dot_dimension_numbers<[1], [0], [0], [1], [0, 0, 1, 1], [], []>} : vector<48x512xbf16>, vector<512x512xbf16>, vector<48x512xf32> -> vector<48x512xf32>
    %4 = arith.mulf %3, %3 : vector<48x512xf32>
    %5 = vector.extract_strided_slice %4 {offsets = [0, 256], sizes = [48, 256], strides = [1, 1]} : vector<48x512xf32> to vector<48x256xf32>
    %6 = vector.extract_strided_slice %4 {offsets = [0, 0], sizes = [48, 256], strides = [1, 1]} : vector<48x512xf32> to vector<48x256xf32>
    %7 = tpu.concatenate %5, %6 in 1 : vector<48x256xf32>, vector<48x256xf32> -> vector<48x512xf32>
    %8 = tpu.iota {dimensions = array<i32: 1>} : vector<1x512xi32>
    %c0_i32 = arith.constant 0 : i32
    %9 = vector.broadcast %c0_i32 : i32 to vector<1x512xi32>
    %10 = arith.cmpi ne, %8, %9 : vector<1x512xi32>
    %c256_i32 = arith.constant 256 : i32
    %11 = vector.broadcast %c256_i32 : i32 to vector<1x512xi32>
    %12 = arith.cmpi ne, %8, %11 : vector<1x512xi32>
    %13 = arith.andi %10, %12 : vector<1x512xi1>
    %cst_4 = arith.constant 0.000000e+00 : f32
    %14 = vector.shape_cast %13 : vector<1x512xi1> to vector<1x512xi1>
    %15 = vector.broadcast %14 : vector<1x512xi1> to vector<48x512xi1>
    %16 = vector.broadcast %cst_4 : f32 to vector<48x512xf32>
    %17 = arith.select %15, %7, %16 : vector<48x512xi1>, vector<48x512xf32>
    %18 = arith.addf %4, %17 : vector<48x512xf32>
    %cst_5 = arith.constant 1.17549435E-38 : f32
    %19 = vector.broadcast %cst_5 : f32 to vector<48x512xf32>
    %20 = arith.addf %18, %19 : vector<48x512xf32>
    %21 = math.rsqrt %20 : vector<48x512xf32>
    %22 = arith.mulf %18, %21 : vector<48x512xf32>
    %c0_6 = arith.constant 0 : index
    %c0_7 = arith.constant 0 : index
    %23 = vector.load %arg5[%c0_6, %c0_7] : memref<1x512xf32, #tpu.memory_space<vmem>>, vector<1x512xf32>
    %24 = vector.broadcast %0 : f32 to vector<1x512xf32>
    %25 = arith.mulf %23, %24 : vector<1x512xf32>
    %26 = vector.broadcast %25 : vector<1x512xf32> to vector<48x512xf32>
    %27 = arith.subf %22, %26 : vector<48x512xf32>
    %cst_8 = arith.constant 0.000000e+00 : f32
    %28 = vector.broadcast %cst_8 : f32 to vector<48x512xf32>
    %29 = arith.maximumf %27, %28 : vector<48x512xf32>
    %30 = arith.mulf %29, %21 : vector<48x512xf32>
    %31 = arith.mulf %3, %30 : vector<48x512xf32>
    %32 = arith.truncf %31 : vector<48x512xf32> to vector<48x512xbf16>
    %c0_9 = arith.constant 0 : index
    %c0_10 = arith.constant 0 : index
    %33 = vector.load %arg4[%c0_9, %c0_10] : memref<512x512xbf16, #tpu.memory_space<vmem>>, vector<512x512xbf16>
    %cst_11 = arith.constant dense<0.000000e+00> : vector<48x512xf32>
    %34 = tpu.matmul %32, %33, %cst_11 {dimension_numbers = #tpu.dot_dimension_numbers<[1], [0], [0], [1], [0, 0, 1, 1], [], []>} : vector<48x512xbf16>, vector<512x512xbf16>, vector<48x512xf32> -> vector<48x512xf32>
    %c0_12 = arith.constant 0 : index
    %c0_13 = arith.constant 0 : index
    %35 = vector.load %arg6[%c0_12, %c0_13] : memref<24x128xf32, #tpu.memory_space<vmem>>, vector<24x128xf32>
    %36 = vector.extract_strided_slice %34 {offsets = [0, 0], sizes = [24, 512], strides = [1, 1]} : vector<48x512xf32> to vector<24x512xf32>
    %37 = vector.extract_strided_slice %36 {offsets = [0, 0], sizes = [24, 128], strides = [1, 1]} : vector<24x512xf32> to vector<24x128xf32>
    %cst_14 = arith.constant 0.000000e+00 : f32
    %38 = vector.broadcast %cst_14 : f32 to vector<1x128xf32>
    %39 = vector.extract_strided_slice %36 {offsets = [0, 128], sizes = [23, 128], strides = [1, 1]} : vector<24x512xf32> to vector<23x128xf32>
    %40 = tpu.concatenate %38, %39 in 0 : vector<1x128xf32>, vector<23x128xf32> -> vector<24x128xf32>
    %41 = arith.addf %37, %40 : vector<24x128xf32>
    %cst_15 = arith.constant 0.000000e+00 : f32
    %42 = vector.broadcast %cst_15 : f32 to vector<2x128xf32>
    %43 = vector.extract_strided_slice %36 {offsets = [0, 256], sizes = [22, 128], strides = [1, 1]} : vector<24x512xf32> to vector<22x128xf32>
    %44 = tpu.concatenate %42, %43 in 0 : vector<2x128xf32>, vector<22x128xf32> -> vector<24x128xf32>
    %45 = arith.addf %41, %44 : vector<24x128xf32>
    %cst_16 = arith.constant 0.000000e+00 : f32
    %46 = vector.broadcast %cst_16 : f32 to vector<3x128xf32>
    %47 = vector.extract_strided_slice %36 {offsets = [0, 384], sizes = [21, 128], strides = [1, 1]} : vector<24x512xf32> to vector<21x128xf32>
    %48 = tpu.concatenate %46, %47 in 0 : vector<3x128xf32>, vector<21x128xf32> -> vector<24x128xf32>
    %49 = arith.addf %45, %48 : vector<24x128xf32>
    %50 = arith.mulf %49, %35 : vector<24x128xf32>
    %c0_17 = arith.constant 0 : index
    %c0_18 = arith.constant 0 : index
    %c0_19 = arith.constant 0 : index
    %51 = vector.load %arg7[%c0_17, %c0_18, %c0_19] : memref<2x24x128xf32, #tpu.memory_space<vmem>>, vector<1x24x128xf32>
    %52 = vector.shape_cast %51 : vector<1x24x128xf32> to vector<24x128xf32>
    %53 = vector.shape_cast %50 : vector<24x128xf32> to vector<1x24x128xf32>
    tpu.vector_store %arg7[%c0_17, %c0_18, %c0_19], %53 {strides = array<i32>} : memref<2x24x128xf32, #tpu.memory_space<vmem>>, vector<1x24x128xf32>,
    %54 = vector.extract_strided_slice %34 {offsets = [24, 0], sizes = [24, 512], strides = [1, 1]} : vector<48x512xf32> to vector<24x512xf32>
    %55 = vector.extract_strided_slice %54 {offsets = [0, 0], sizes = [24, 128], strides = [1, 1]} : vector<24x512xf32> to vector<24x128xf32>
    %cst_20 = arith.constant 0.000000e+00 : f32
    %56 = vector.broadcast %cst_20 : f32 to vector<1x128xf32>
    %57 = vector.extract_strided_slice %54 {offsets = [0, 128], sizes = [23, 128], strides = [1, 1]} : vector<24x512xf32> to vector<23x128xf32>
    %58 = tpu.concatenate %56, %57 in 0 : vector<1x128xf32>, vector<23x128xf32> -> vector<24x128xf32>
    %59 = arith.addf %55, %58 : vector<24x128xf32>
    %cst_21 = arith.constant 0.000000e+00 : f32
    %60 = vector.broadcast %cst_21 : f32 to vector<2x128xf32>
    %61 = vector.extract_strided_slice %54 {offsets = [0, 256], sizes = [22, 128], strides = [1, 1]} : vector<24x512xf32> to vector<22x128xf32>
    %62 = tpu.concatenate %60, %61 in 0 : vector<2x128xf32>, vector<22x128xf32> -> vector<24x128xf32>
    %63 = arith.addf %59, %62 : vector<24x128xf32>
    %cst_22 = arith.constant 0.000000e+00 : f32
    %64 = vector.broadcast %cst_22 : f32 to vector<3x128xf32>
    %65 = vector.extract_strided_slice %54 {offsets = [0, 384], sizes = [21, 128], strides = [1, 1]} : vector<24x512xf32> to vector<21x128xf32>
    %66 = tpu.concatenate %64, %65 in 0 : vector<3x128xf32>, vector<21x128xf32> -> vector<24x128xf32>
    %67 = arith.addf %63, %66 : vector<24x128xf32>
    %68 = arith.mulf %67, %35 : vector<24x128xf32>
    %c1 = arith.constant 1 : index
    %c0_23 = arith.constant 0 : index
    %c0_24 = arith.constant 0 : index
    %69 = vector.load %arg7[%c1, %c0_23, %c0_24] : memref<2x24x128xf32, #tpu.memory_space<vmem>>, vector<1x24x128xf32>
    %70 = vector.shape_cast %69 : vector<1x24x128xf32> to vector<24x128xf32>
    %71 = vector.shape_cast %68 : vector<24x128xf32> to vector<1x24x128xf32>
    tpu.vector_store %arg7[%c1, %c0_23, %c0_24], %71 {strides = array<i32>} : memref<2x24x128xf32, #tpu.memory_space<vmem>>, vector<1x24x128xf32>,
    return
  }
  func.func @transform_0(%arg0: i32) -> i32 {
    %c0_i32 = arith.constant 0 : i32
    %c0_i32_0 = arith.constant 0 : i32
    return %c0_i32 : i32
  }
  func.func @transform_1(%arg0: i32) -> (i32, i32) {
    %c0_i32 = arith.constant 0 : i32
    %c0_i32_0 = arith.constant 0 : i32
    return %arg0, %c0_i32 : i32, i32
  }
  func.func @transform_2(%arg0: i32) -> (i32, i32) {
    %c0_i32 = arith.constant 0 : i32
    %c0_i32_0 = arith.constant 0 : i32
    %c0_i32_1 = arith.constant 0 : i32
    return %c0_i32, %c0_i32_0 : i32, i32
  }
  func.func @transform_3(%arg0: i32) -> (i32, i32) {
    %c0_i32 = arith.constant 0 : i32
    %c0_i32_0 = arith.constant 0 : i32
    %c0_i32_1 = arith.constant 0 : i32
    return %c0_i32, %c0_i32_0 : i32, i32
  }
  func.func @transform_4(%arg0: i32) -> (i32, i32) {
    %c0_i32 = arith.constant 0 : i32
    %c0_i32_0 = arith.constant 0 : i32
    %c0_i32_1 = arith.constant 0 : i32
    return %c0_i32, %c0_i32_0 : i32, i32
  }
  func.func @transform_5(%arg0: i32) -> (i32, i32) {
    %c0_i32 = arith.constant 0 : i32
    %c0_i32_0 = arith.constant 0 : i32
    %c0_i32_1 = arith.constant 0 : i32
    return %c0_i32, %c0_i32_0 : i32, i32
  }
  func.func @transform_6(%arg0: i32) -> (i32, i32, i32) {
    %c0_i32 = arith.constant 0 : i32
    %c0_i32_0 = arith.constant 0 : i32
    %c0_i32_1 = arith.constant 0 : i32
    return %arg0, %c0_i32, %c0_i32_0 : i32, i32, i32
  }
}

</mosaic_0001>

<llo_original>
// kernel: tpu_custom_call.1
$region0: #{tpu_custom_call.1}
  #allocation0 [shape = 'u32[]', space=smem, size = 0x4, offset = 0x4, fixed_abs, tag = 'smem constant byte address 0x4 - core index']
  #allocation1 [shape = 'u32[144,128]{1,0:T(1,128)}', space=vmem, size = 0x12000, scoped, tag = 'internal scratch']
  #allocation2 [shape = 'f32[1]{0:T(128)S(6)}', space=smem, size = 0x200, scoped, tag = 'scoped memory for tpu_custom_call.1']
  %s0 = inlined_call_operand.<no memory space> [shape: f32[1], index: 0, kind: input, shape index: {}]
  %s1 = inlined_call_operand.hbm [shape: bf16[48,512], index: 1, kind: input, shape index: {}]
  %s2 = inlined_call_operand.hbm [shape: bf16[512,512], index: 2, kind: input, shape index: {}]
  %s3 = inlined_call_operand.hbm [shape: bf16[512,512], index: 3, kind: input, shape index: {}]
  %s4 = inlined_call_operand.vmem [shape: f32[1,512], index: 4, kind: input, shape index: {}]
  %s5 = inlined_call_operand.hbm [shape: f32[24,128], index: 5, kind: input, shape index: {}]
  %s6 = inlined_call_operand.hbm [shape: f32[2,24,128], index: 6, kind: output, shape index: {}]
  %s7 = sld [smem:[#allocation0]]
  $region50: #{tpu_custom_call.1} parent=0
    _
  %s9 = ssub.s32 1, %s7
  %s10 = scalar_select 0, %s9, %s7
  %11 = sst [smem:[#allocation2]] %s0
  $region1: #{tpu_custom_call.1} parent=0
    #allocation3 [shape = 'u8[49152]{0}', space=vmem, size = 0xc000, scoped, tag = 'input window, operand 1, single buffered']
    #allocation4 [shape = 's32[1]{0}', space=sflag, size = 0x4, scoped, tag = 'scoped memory for tpu_custom_call.1']
    #allocation5 [shape = 's32[1]{0}', space=sflag, size = 0x4, scoped, tag = 'scoped memory for tpu_custom_call.1']
    #allocation6 [shape = 'u8[524288]{0}', space=vmem, size = 0x80000, scoped, tag = 'input window, operand 2, single buffered']
    #allocation7 [shape = 's32[1]{0}', space=sflag, size = 0x4, scoped, tag = 'scoped memory for tpu_custom_call.1']
    #allocation8 [shape = 'u8[524288]{0}', space=vmem, size = 0x80000, scoped, tag = 'input window, operand 3, single buffered']
    #allocation9 [shape = 'u8[12288]{0}', space=vmem, size = 0x3000, scoped, tag = 'input window, operand 5, single buffered']
    #allocation10 [shape = 's32[1]{0}', space=sflag, size = 0x4, scoped, tag = 'scoped memory for tpu_custom_call.1']
    #allocation11 [shape = 'u8[24576]{0}', space=vmem, size = 0x6000, scoped, tag = 'output window, operand 0, single buffered']
    %12 = vsyncpa [#allocation4], 0
    %13 = vsyncpa [#allocation7], 0
    %14 = vsyncpa [#allocation10], 0
    %15 = vsyncpa [#allocation5], 0
    // Predicated region
    $region2: #{tpu_custom_call.1} parent=1 // pred_check
      _
    $region3: #{tpu_custom_call.1} parent=1 // pred_check_branch
      %17 = sbr.rel (0) target = $region5
    $region4: #{tpu_custom_call.1} parent=1 // pred_region
      _
    $region5: #{tpu_custom_call.1} parent=1 // pred_fallthru
      _
    // Predicated region
    $region6: #{tpu_custom_call.1} parent=1 // pred_check
      _
    $region7: #{tpu_custom_call.1} parent=1 // pred_check_branch
      %19 = sbr.rel (0) target = $region9
    $region8: #{tpu_custom_call.1} parent=1 // pred_region
      %s21 = ssub.s32 1536, 1536
      %22 = vsyncadd [#allocation4], %s21
      %s23 = sshll.u32 [#allocation3], 4
      %s24 = int_to_ptr.vmem [resolvable:$true] %s23
      %29 = dma.hbm_to_vmem [thread:$0]  %s1, 1536, %s24, [#allocation4], 256, 256, 16
    $region9: #{tpu_custom_call.1} parent=1 // pred_fallthru
      _
    // Predicated region
    $region10: #{tpu_custom_call.1} parent=1 // pred_check
      _
    $region11: #{tpu_custom_call.1} parent=1 // pred_check_branch
      %31 = sbr.rel (0) target = $region13
    $region12: #{tpu_custom_call.1} parent=1 // pred_region
      %s33 = ssub.s32 16384, 16384
      %34 = vsyncadd [#allocation7], %s33
      %s35 = sshll.u32 [#allocation6], 4
      %s36 = int_to_ptr.vmem [resolvable:$true] %s35
      %41 = dma.hbm_to_vmem [thread:$0]  %s2, 16384, %s36, [#allocation7], 256, 256, 16
    $region13: #{tpu_custom_call.1} parent=1 // pred_fallthru
      _
    // Predicated region
    $region14: #{tpu_custom_call.1} parent=1 // pred_check
      _
    $region15: #{tpu_custom_call.1} parent=1 // pred_check_branch
      %43 = sbr.rel (0) target = $region17
    $region16: #{tpu_custom_call.1} parent=1 // pred_region
      %s45 = ssub.s32 16384, 16384
      %46 = vsyncadd [#allocation7], %s45
      %s47 = sshll.u32 [#allocation8], 4
      %s48 = int_to_ptr.vmem [resolvable:$true] %s47
      %53 = dma.hbm_to_vmem [thread:$0]  %s3, 16384, %s48, [#allocation7], 256, 256, 16
    $region17: #{tpu_custom_call.1} parent=1 // pred_fallthru
      _
    // Predicated region
    $region18: #{tpu_custom_call.1} parent=1 // pred_check
      _
    $region19: #{tpu_custom_call.1} parent=1 // pred_check_branch
      %55 = sbr.rel (0) target = $region21
    $region20: #{tpu_custom_call.1} parent=1 // pred_region
      _
    $region21: #{tpu_custom_call.1} parent=1 // pred_fallthru
      _
    // Predicated region
    $region22: #{tpu_custom_call.1} parent=1 // pred_check
      _
    $region23: #{tpu_custom_call.1} parent=1 // pred_check_branch
      %57 = sbr.rel (0) target = $region25
    $region24: #{tpu_custom_call.1} parent=1 // pred_region
      %s59 = ssub.s32 384, 384
      %60 = vsyncadd [#allocation10], %s59
      %s61 = sshll.u32 [#allocation9], 4
      %s62 = int_to_ptr.vmem [resolvable:$true] %s61
      %67 = dma.hbm_to_vmem [thread:$0]  %s5, 384, %s62, [#allocation10], 128, 128, 8
    $region25: #{tpu_custom_call.1} parent=1 // pred_fallthru
      _
    // Predicated region
    $region26: #{tpu_custom_call.1} parent=1 // pred_check
      _
    $region27: #{tpu_custom_call.1} parent=1 // pred_check_branch
      %69 = sbr.rel (0) target = $region29
    $region28: #{tpu_custom_call.1} parent=1 // pred_region
      %70 = dma.done [#allocation4], 1536
    $region29: #{tpu_custom_call.1} parent=1 // pred_fallthru
      _
    // Predicated region
    $region30: #{tpu_custom_call.1} parent=1 // pred_check
      _
    $region31: #{tpu_custom_call.1} parent=1 // pred_check_branch
      %72 = sbr.rel (0) target = $region33
    $region32: #{tpu_custom_call.1} parent=1 // pred_region
      %73 = dma.done [#allocation7], 16384
    $region33: #{tpu_custom_call.1} parent=1 // pred_fallthru
      _
    // Predicated region
    $region34: #{tpu_custom_call.1} parent=1 // pred_check
      _
    $region35: #{tpu_custom_call.1} parent=1 // pred_check_branch
      %75 = sbr.rel (0) target = $region37
    $region36: #{tpu_custom_call.1} parent=1 // pred_region
      %76 = dma.done [#allocation7], 16384
    $region37: #{tpu_custom_call.1} parent=1 // pred_fallthru
      _
    // Predicated region
    $region38: #{tpu_custom_call.1} parent=1 // pred_check
      _
    $region39: #{tpu_custom_call.1} parent=1 // pred_check_branch
      %78 = sbr.rel (0) target = $region41
    $region40: #{tpu_custom_call.1} parent=1 // pred_region
      %79 = dma.done [#allocation10], 384
    $region41: #{tpu_custom_call.1} parent=1 // pred_fallthru
      _
    %s80 = sld [smem:[#allocation2]]
    %v81 = vld [vmem:[#allocation3] sm:$0xff]
    %v82 = vld [vmem:[#allocation3 + $0x8] sm:$0xff]
    %v83 = vld [vmem:[#allocation3 + $0x10] sm:$0xff]
    %v84 = vld [vmem:[#allocation3 + $0x18] sm:$0xff]
    %v85 = vld [vmem:[#allocation3 + $0x20] sm:$0xff]
    %v86 = vld [vmem:[#allocation3 + $0x28] sm:$0xff]
    %v87 = vld [vmem:[#allocation3 + $0x30] sm:$0xff]
    %v88 = vld [vmem:[#allocation3 + $0x38] sm:$0xff]
    %v89 = vld [vmem:[#allocation3 + $0x40] sm:$0xff]
    %v90 = vld [vmem:[#allocation3 + $0x48] sm:$0xff]
    %v91 = vld [vmem:[#allocation3 + $0x50] sm:$0xff]
    %v92 = vld [vmem:[#allocation3 + $0x58] sm:$0xff]
    %v93 = vld [vmem:[#allocation6] sm:$0xff]
    %v94 = vld [vmem:[#allocation6 + $0x8] sm:$0xff]
    %v95 = vld [vmem:[#allocation6 + $0x10] sm:$0xff]
    %v96 = vld [vmem:[#allocation6 + $0x18] sm:$0xff]
    %v97 = vld [vmem:[#allocation6 + $0x20] sm:$0xff]
    %v98 = vld [vmem:[#allocation6 + $0x28] sm:$0xff]
    %v99 = vld [vmem:[#allocation6 + $0x30] sm:$0xff]
    %v100 = vld [vmem:[#allocation6 + $0x38] sm:$0xff]
    %v101 = vld [vmem:[#allocation6 + $0x40] sm:$0xff]
    %v102 = vld [vmem:[#allocation6 + $0x48] sm:$0xff]
    %v103 = vld [vmem:[#allocation6 + $0x50] sm:$0xff]
    %v104 = vld [vmem:[#allocation6 + $0x58] sm:$0xff]
    %v105 = vld [vmem:[#allocation6 + $0x60] sm:$0xff]
    %v106 = vld [vmem:[#allocation6 + $0x68] sm:$0xff]
    %v107 = vld [vmem:[#allocation6 + $0x70] sm:$0xff]
    %v108 = vld [vmem:[#allocation6 + $0x78] sm:$0xff]
    %v109 = vld [vmem:[#allocation6 + $0x80] sm:$0xff]
    %v110 = vld [vmem:[#allocation6 + $0x88] sm:$0xff]
    %v111 = vld [vmem:[#allocation6 + $0x90] sm:$0xff]
    %v112 = vld [vmem:[#allocation6 + $0x98] sm:$0xff]
    %v113 = vld [vmem:[#allocation6 + $0xa0] sm:$0xff]
    %v114 = vld [vmem:[#allocation6 + $0xa8] sm:$0xff]
    %v115 = vld [vmem:[#allocation6 + $0xb0] sm:$0xff]
    %v116 = vld [vmem:[#allocation6 + $0xb8] sm:$0xff]
    %v117 = vld [vmem:[#allocation6 + $0xc0] sm:$0xff]
    %v118 = vld [vmem:[#allocation6 + $0xc8] sm:$0xff]
    %v119 = vld [vmem:[#allocation6 + $0xd0] sm:$0xff]
    %v120 = vld [vmem:[#allocation6 + $0xd8] sm:$0xff]
    %v121 = vld [vmem:[#allocation6 + $0xe0] sm:$0xff]
    %v122 = vld [vmem:[#allocation6 + $0xe8] sm:$0xff]
    %v123 = vld [vmem:[#allocation6 + $0xf0] sm:$0xff]
    %v124 = vld [vmem:[#allocation6 + $0xf8] sm:$0xff]
    %v125 = vld [vmem:[#allocation6 + $0x100] sm:$0xff]
    %v126 = vld [vmem:[#allocation6 + $0x108] sm:$0xff]
    %v127 = vld [vmem:[#allocation6 + $0x110] sm:$0xff]
    %v128 = vld [vmem:[#allocation6 + $0x118] sm:$0xff]
    %v129 = vld [vmem:[#allocation6 + $0x120] sm:$0xff]
    %v130 = vld [vmem:[#allocation6 + $0x128] sm:$0xff]
    %v131 = vld [vmem:[#allocation6 + $0x130] sm:$0xff]
    %v132 = vld [vmem:[#allocation6 + $0x138] sm:$0xff]
    %v133 = vld [vmem:[#allocation6 + $0x140] sm:$0xff]
    %v134 = vld [vmem:[#allocation6 + $0x148] sm:$0xff]
    %v135 = vld [vmem:[#allocation6 + $0x150] sm:$0xff]
    %v136 = vld [vmem:[#allocation6 + $0x158] sm:$0xff]
    %v137 = vld [vmem:[#allocation6 + $0x160] sm:$0xff]
    %v138 = vld [vmem:[#allocation6 + $0x168] sm:$0xff]
    %v139 = vld [vmem:[#allocation6 + $0x170] sm:$0xff]
    %v140 = vld [vmem:[#allocation6 + $0x178] sm:$0xff]
    %v141 = vld [vmem:[#allocation6 + $0x180] sm:$0xff]
    %v142 = vld [vmem:[#allocation6 + $0x188] sm:$0xff]
    %v143 = vld [vmem:[#allocation6 + $0x190] sm:$0xff]
    %v144 = vld [vmem:[#allocation6 + $0x198] sm:$0xff]
    %v145 = vld [vmem:[#allocation6 + $0x1a0] sm:$0xff]
    %v146 = vld [vmem:[#allocation6 + $0x1a8] sm:$0xff]
    %v147 = vld [vmem:[#allocation6 + $0x1b0] sm:$0xff]
    %v148 = vld [vmem:[#allocation6 + $0x1b8] sm:$0xff]
    %v149 = vld [vmem:[#allocation6 + $0x1c0] sm:$0xff]
    %v150 = vld [vmem:[#allocation6 + $0x1c8] sm:$0xff]
    %v151 = vld [vmem:[#allocation6 + $0x1d0] sm:$0xff]
    %v152 = vld [vmem:[#allocation6 + $0x1d8] sm:$0xff]
    %v153 = vld [vmem:[#allocation6 + $0x1e0] sm:$0xff]
    %v154 = vld [vmem:[#allocation6 + $0x1e8] sm:$0xff]
    %v155 = vld [vmem:[#allocation6 + $0x1f0] sm:$0xff]
    %v156 = vld [vmem:[#allocation6 + $0x1f8] sm:$0xff]
    %v157 = vld [vmem:[#allocation6 + $0x200] sm:$0xff]
    %v158 = vld [vmem:[#allocation6 + $0x208] sm:$0xff]
    %v159 = vld [vmem:[#allocation6 + $0x210] sm:$0xff]
    %v160 = vld [vmem:[#allocation6 + $0x218] sm:$0xff]
    %v161 = vld [vmem:[#allocation6 + $0x220] sm:$0xff]
    %v162 = vld [vmem:[#allocation6 + $0x228] sm:$0xff]
    %v163 = vld [vmem:[#allocation6 + $0x230] sm:$0xff]
    %v164 = vld [vmem:[#allocation6 + $0x238] sm:$0xff]
    %v165 = vld [vmem:[#allocation6 + $0x240] sm:$0xff]
    %v166 = vld [vmem:[#allocation6 + $0x248] sm:$0xff]
    %v167 = vld [vmem:[#allocation6 + $0x250] sm:$0xff]
    %v168 = vld [vmem:[#allocation6 + $0x258] sm:$0xff]
    %v169 = vld [vmem:[#allocation6 + $0x260] sm:$0xff]
    %v170 = vld [vmem:[#allocation6 + $0x268] sm:$0xff]
    %v171 = vld [vmem:[#allocation6 + $0x270] sm:$0xff]
    %v172 = vld [vmem:[#allocation6 + $0x278] sm:$0xff]
    %v173 = vld [vmem:[#allocation6 + $0x280] sm:$0xff]
    %v174 = vld [vmem:[#allocation6 + $0x288] sm:$0xff]
    %v175 = vld [vmem:[#allocation6 + $0x290] sm:$0xff]
    %v176 = vld [vmem:[#allocation6 + $0x298] sm:$0xff]
    %v177 = vld [vmem:[#allocation6 + $0x2a0] sm:$0xff]
    %v178 = vld [vmem:[#allocation6 + $0x2a8] sm:$0xff]
    %v179 = vld [vmem:[#allocation6 + $0x2b0] sm:$0xff]
    %v180 = vld [vmem:[#allocation6 + $0x2b8] sm:$0xff]
    %v181 = vld [vmem:[#allocation6 + $0x2c0] sm:$0xff]
    %v182 = vld [vmem:[#allocation6 + $0x2c8] sm:$0xff]
    %v183 = vld [vmem:[#allocation6 + $0x2d0] sm:$0xff]
    %v184 = vld [vmem:[#allocation6 + $0x2d8] sm:$0xff]
    %v185 = vld [vmem:[#allocation6 + $0x2e0] sm:$0xff]
    %v186 = vld [vmem:[#allocation6 + $0x2e8] sm:$0xff]
    %v187 = vld [vmem:[#allocation6 + $0x2f0] sm:$0xff]
    %v188 = vld [vmem:[#allocation6 + $0x2f8] sm:$0xff]
    %v189 = vld [vmem:[#allocation6 + $0x300] sm:$0xff]
    %v190 = vld [vmem:[#allocation6 + $0x308] sm:$0xff]
    %v191 = vld [vmem:[#allocation6 + $0x310] sm:$0xff]
    %v192 = vld [vmem:[#allocation6 + $0x318] sm:$0xff]
    %v193 = vld [vmem:[#allocation6 + $0x320] sm:$0xff]
    %v194 = vld [vmem:[#allocation6 + $0x328] sm:$0xff]
    %v195 = vld [vmem:[#allocation6 + $0x330] sm:$0xff]
    %v196 = vld [vmem:[#allocation6 + $0x338] sm:$0xff]
    %v197 = vld [vmem:[#allocation6 + $0x340] sm:$0xff]
    %v198 = vld [vmem:[#allocation6 + $0x348] sm:$0xff]
    %v199 = vld [vmem:[#allocation6 + $0x350] sm:$0xff]
    %v200 = vld [vmem:[#allocation6 + $0x358] sm:$0xff]
    %v201 = vld [vmem:[#allocation6 + $0x360] sm:$0xff]
    %v202 = vld [vmem:[#allocation6 + $0x368] sm:$0xff]
    %v203 = vld [vmem:[#allocation6 + $0x370] sm:$0xff]
    %v204 = vld [vmem:[#allocation6 + $0x378] sm:$0xff]
    %v205 = vld [vmem:[#allocation6 + $0x380] sm:$0xff]
    %v206 = vld [vmem:[#allocation6 + $0x388] sm:$0xff]
    %v207 = vld [vmem:[#allocation6 + $0x390] sm:$0xff]
    %v208 = vld [vmem:[#allocation6 + $0x398] sm:$0xff]
    %v209 = vld [vmem:[#allocation6 + $0x3a0] sm:$0xff]
    %v210 = vld [vmem:[#allocation6 + $0x3a8] sm:$0xff]
    %v211 = vld [vmem:[#allocation6 + $0x3b0] sm:$0xff]
    %v212 = vld [vmem:[#allocation6 + $0x3b8] sm:$0xff]
    %v213 = vld [vmem:[#allocation6 + $0x3c0] sm:$0xff]
    %v214 = vld [vmem:[#allocation6 + $0x3c8] sm:$0xff]
    %v215 = vld [vmem:[#allocation6 + $0x3d0] sm:$0xff]
    %v216 = vld [vmem:[#allocation6 + $0x3d8] sm:$0xff]
    %v217 = vld [vmem:[#allocation6 + $0x3e0] sm:$0xff]
    %v218 = vld [vmem:[#allocation6 + $0x3e8] sm:$0xff]
    %v219 = vld [vmem:[#allocation6 + $0x3f0] sm:$0xff]
    %v220 = vld [vmem:[#allocation6 + $0x3f8] sm:$0xff]
    %v233 = vunpack.c.l.b16 %v81
    %v234 = vunpack.c.h.b16 %v81
    %v235 = vunpack.c.l.b16 %v82
    %v236 = vunpack.c.h.b16 %v82
    %v237 = vunpack.c.l.b16 %v83
    %v238 = vunpack.c.h.b16 %v83
    %v239 = vunpack.c.l.b16 %v84
    %v240 = vunpack.c.h.b16 %v84
    %v241 = vunpack.c.l.b16 %v85
    %v242 = vunpack.c.h.b16 %v85
    %v243 = vunpack.c.l.b16 %v86
    %v244 = vunpack.c.h.b16 %v86
    %v245 = vunpack.c.l.b16 %v87
    %v246 = vunpack.c.h.b16 %v87
    %v247 = vunpack.c.l.b16 %v88
    %v248 = vunpack.c.h.b16 %v88
    %v249 = vunpack.c.l.b16 %v89
    %v250 = vunpack.c.h.b16 %v89
    %v251 = vunpack.c.l.b16 %v90
    %v252 = vunpack.c.h.b16 %v90
    %v253 = vunpack.c.l.b16 %v91
    %v254 = vunpack.c.h.b16 %v91
    %v255 = vunpack.c.l.b16 %v92
    %v256 = vunpack.c.h.b16 %v92
    %v257 = vpack.c.b16 %v237, %v233
    %v258 = vpack.c.b16 %v238, %v234
    %v259 = vpack.c.b16 %v239, %v235
    %v260 = vpack.c.b16 %v240, %v236
    %v261 = vpack.c.b16 %v245, %v241
    %v262 = vpack.c.b16 %v246, %v242
    %v263 = vpack.c.b16 %v247, %v243
    %v264 = vpack.c.b16 %v248, %v244
    %v265 = vpack.c.b16 %v253, %v249
    %v266 = vpack.c.b16 %v254, %v250
    %v267 = vpack.c.b16 %v255, %v251
    %v268 = vpack.c.b16 %v256, %v252
    %v409 = vunpack.c.l.b16 %v93
    %v410 = vunpack.c.h.b16 %v93
    %v411 = vunpack.c.l.b16 %v94
    %v412 = vunpack.c.h.b16 %v94
    %v413 = vunpack.c.l.b16 %v95
    %v414 = vunpack.c.h.b16 %v95
    %v415 = vunpack.c.l.b16 %v96
    %v416 = vunpack.c.h.b16 %v96
    %v417 = vunpack.c.l.b16 %v97
    %v418 = vunpack.c.h.b16 %v97
    %v419 = vunpack.c.l.b16 %v98
    %v420 = vunpack.c.h.b16 %v98
    %v421 = vunpack.c.l.b16 %v99
    %v422 = vunpack.c.h.b16 %v99
    %v423 = vunpack.c.l.b16 %v100
    %v424 = vunpack.c.h.b16 %v100
    %v425 = vunpack.c.l.b16 %v101
    %v426 = vunpack.c.h.b16 %v101
    %v427 = vunpack.c.l.b16 %v102
    %v428 = vunpack.c.h.b16 %v102
    %v429 = vunpack.c.l.b16 %v103
    %v430 = vunpack.c.h.b16 %v103
    %v431 = vunpack.c.l.b16 %v104
    %v432 = vunpack.c.h.b16 %v104
    %v433 = vunpack.c.l.b16 %v105
    %v434 = vunpack.c.h.b16 %v105
    %v435 = vunpack.c.l.b16 %v106
    %v436 = vunpack.c.h.b16 %v106
    %v437 = vunpack.c.l.b16 %v107
    %v438 = vunpack.c.h.b16 %v107
    %v439 = vunpack.c.l.b16 %v108
    %v440 = vunpack.c.h.b16 %v108
    %v441 = vunpack.c.l.b16 %v109
    %v442 = vunpack.c.h.b16 %v109
    %v443 = vunpack.c.l.b16 %v110
    %v444 = vunpack.c.h.b16 %v110
    %v445 = vunpack.c.l.b16 %v111
    %v446 = vunpack.c.h.b16 %v111
    %v447 = vunpack.c.l.b16 %v112
    %v448 = vunpack.c.h.b16 %v112
    %v449 = vunpack.c.l.b16 %v113
    %v450 = vunpack.c.h.b16 %v113
    %v451 = vunpack.c.l.b16 %v114
    %v452 = vunpack.c.h.b16 %v114
    %v453 = vunpack.c.l.b16 %v115
    %v454 = vunpack.c.h.b16 %v115
    %v455 = vunpack.c.l.b16 %v116
    %v456 = vunpack.c.h.b16 %v116
    %v457 = vunpack.c.l.b16 %v117
    %v458 = vunpack.c.h.b16 %v117
    %v459 = vunpack.c.l.b16 %v118
    %v460 = vunpack.c.h.b16 %v118
    %v461 = vunpack.c.l.b16 %v119
    %v462 = vunpack.c.h.b16 %v119
    %v463 = vunpack.c.l.b16 %v120
    %v464 = vunpack.c.h.b16 %v120
    %v465 = vunpack.c.l.b16 %v121
    %v466 = vunpack.c.h.b16 %v121
    %v467 = vunpack.c.l.b16 %v122
    %v468 = vunpack.c.h.b16 %v122
    %v469 = vunpack.c.l.b16 %v123
    %v470 = vunpack.c.h.b16 %v123
    %v471 = vunpack.c.l.b16 %v124
    %v472 = vunpack.c.h.b16 %v124
    %v473 = vunpack.c.l.b16 %v125
    %v474 = vunpack.c.h.b16 %v125
    %v475 = vunpack.c.l.b16 %v126
    %v476 = vunpack.c.h.b16 %v126
    %v477 = vunpack.c.l.b16 %v127
    %v478 = vunpack.c.h.b16 %v127
    %v479 = vunpack.c.l.b16 %v128
    %v480 = vunpack.c.h.b16 %v128
    %v481 = vunpack.c.l.b16 %v129
    %v482 = vunpack.c.h.b16 %v129
    %v483 = vunpack.c.l.b16 %v130
    %v484 = vunpack.c.h.b16 %v130
    %v485 = vunpack.c.l.b16 %v131
    %v486 = vunpack.c.h.b16 %v131
    %v487 = vunpack.c.l.b16 %v132
    %v488 = vunpack.c.h.b16 %v132
    %v489 = vunpack.c.l.b16 %v133
    %v490 = vunpack.c.h.b16 %v133
    %v491 = vunpack.c.l.b16 %v134
    %v492 = vunpack.c.h.b16 %v134
    %v493 = vunpack.c.l.b16 %v135
    %v494 = vunpack.c.h.b16 %v135
    %v495 = vunpack.c.l.b16 %v136
    %v496 = vunpack.c.h.b16 %v136
    %v497 = vunpack.c.l.b16 %v137
    %v498 = vunpack.c.h.b16 %v137
    %v499 = vunpack.c.l.b16 %v138
    %v500 = vunpack.c.h.b16 %v138
    %v501 = vunpack.c.l.b16 %v139
    %v502 = vunpack.c.h.b16 %v139
    %v503 = vunpack.c.l.b16 %v140
    %v504 = vunpack.c.h.b16 %v140
    %v505 = vunpack.c.l.b16 %v141
    %v506 = vunpack.c.h.b16 %v141
    %v507 = vunpack.c.l.b16 %v142
    %v508 = vunpack.c.h.b16 %v142
    %v509 = vunpack.c.l.b16 %v143
    %v510 = vunpack.c.h.b16 %v143
    %v511 = vunpack.c.l.b16 %v144
    %v512 = vunpack.c.h.b16 %v144
    %v513 = vunpack.c.l.b16 %v145
    %v514 = vunpack.c.h.b16 %v145
    %v515 = vunpack.c.l.b16 %v146
    %v516 = vunpack.c.h.b16 %v146
    %v517 = vunpack.c.l.b16 %v147
    %v518 = vunpack.c.h.b16 %v147
    %v519 = vunpack.c.l.b16 %v148
    %v520 = vunpack.c.h.b16 %v148
    %v521 = vunpack.c.l.b16 %v149
    %v522 = vunpack.c.h.b16 %v149
    %v523 = vunpack.c.l.b16 %v150
    %v524 = vunpack.c.h.b16 %v150
    %v525 = vunpack.c.l.b16 %v151
    %v526 = vunpack.c.h.b16 %v151
    %v527 = vunpack.c.l.b16 %v152
    %v528 = vunpack.c.h.b16 %v152
    %v529 = vunpack.c.l.b16 %v153
    %v530 = vunpack.c.h.b16 %v153
    %v531 = vunpack.c.l.b16 %v154
    %v532 = vunpack.c.h.b16 %v154
    %v533 = vunpack.c.l.b16 %v155
    %v534 = vunpack.c.h.b16 %v155
    %v535 = vunpack.c.l.b16 %v156
    %v536 = vunpack.c.h.b16 %v156
    %v537 = vunpack.c.l.b16 %v157
    %v538 = vunpack.c.h.b16 %v157
    %v539 = vunpack.c.l.b16 %v158
    %v540 = vunpack.c.h.b16 %v158
    %v541 = vunpack.c.l.b16 %v159
    %v542 = vunpack.c.h.b16 %v159
    %v543 = vunpack.c.l.b16 %v160
    %v544 = vunpack.c.h.b16 %v160
    %v545 = vunpack.c.l.b16 %v161
    %v546 = vunpack.c.h.b16 %v161
    %v547 = vunpack.c.l.b16 %v162
    %v548 = vunpack.c.h.b16 %v162
    %v549 = vunpack.c.l.b16 %v163
    %v550 = vunpack.c.h.b16 %v163
    %v551 = vunpack.c.l.b16 %v164
    %v552 = vunpack.c.h.b16 %v164
    %v553 = vunpack.c.l.b16 %v165
    %v554 = vunpack.c.h.b16 %v165
    %v555 = vunpack.c.l.b16 %v166
    %v556 = vunpack.c.h.b16 %v166
    %v557 = vunpack.c.l.b16 %v167
    %v558 = vunpack.c.h.b16 %v167
    %v559 = vunpack.c.l.b16 %v168
    %v560 = vunpack.c.h.b16 %v168
    %v561 = vunpack.c.l.b16 %v169
    %v562 = vunpack.c.h.b16 %v169
    %v563 = vunpack.c.l.b16 %v170
    %v564 = vunpack.c.h.b16 %v170
    %v565 = vunpack.c.l.b16 %v171
    %v566 = vunpack.c.h.b16 %v171
    %v567 = vunpack.c.l.b16 %v172
    %v568 = vunpack.c.h.b16 %v172
    %v569 = vunpack.c.l.b16 %v173
    %v570 = vunpack.c.h.b16 %v173
    %v571 = vunpack.c.l.b16 %v174
    %v572 = vunpack.c.h.b16 %v174
    %v573 = vunpack.c.l.b16 %v175
    %v574 = vunpack.c.h.b16 %v175
    %v575 = vunpack.c.l.b16 %v176
    %v576 = vunpack.c.h.b16 %v176
    %v577 = vunpack.c.l.b16 %v177
    %v578 = vunpack.c.h.b16 %v177
    %v579 = vunpack.c.l.b16 %v178
    %v580 = vunpack.c.h.b16 %v178
    %v581 = vunpack.c.l.b16 %v179
    %v582 = vunpack.c.h.b16 %v179
    %v583 = vunpack.c.l.b16 %v180
    %v584 = vunpack.c.h.b16 %v180
    %v585 = vunpack.c.l.b16 %v181
    %v586 = vunpack.c.h.b16 %v181
    %v587 = vunpack.c.l.b16 %v182
    %v588 = vunpack.c.h.b16 %v182
    %v589 = vunpack.c.l.b16 %v183
    %v590 = vunpack.c.h.b16 %v183
    %v591 = vunpack.c.l.b16 %v184
    %v592 = vunpack.c.h.b16 %v184
    %v593 = vunpack.c.l.b16 %v185
    %v594 = vunpack.c.h.b16 %v185
    %v595 = vunpack.c.l.b16 %v186
    %v596 = vunpack.c.h.b16 %v186
    %v597 = vunpack.c.l.b16 %v187
    %v598 = vunpack.c.h.b16 %v187
    %v599 = vunpack.c.l.b16 %v188
    %v600 = vunpack.c.h.b16 %v188
    %v601 = vunpack.c.l.b16 %v189
    %v602 = vunpack.c.h.b16 %v189
    %v603 = vunpack.c.l.b16 %v190
    %v604 = vunpack.c.h.b16 %v190
    %v605 = vunpack.c.l.b16 %v191
    %v606 = vunpack.c.h.b16 %v191
    %v607 = vunpack.c.l.b16 %v192
    %v608 = vunpack.c.h.b16 %v192
    %v609 = vunpack.c.l.b16 %v193
    %v610 = vunpack.c.h.b16 %v193
    %v611 = vunpack.c.l.b16 %v194
    %v612 = vunpack.c.h.b16 %v194
    %v613 = vunpack.c.l.b16 %v195
    %v614 = vunpack.c.h.b16 %v195
    %v615 = vunpack.c.l.b16 %v196
    %v616 = vunpack.c.h.b16 %v196
    %v617 = vunpack.c.l.b16 %v197
    %v618 = vunpack.c.h.b16 %v197
    %v619 = vunpack.c.l.b16 %v198
    %v620 = vunpack.c.h.b16 %v198
    %v621 = vunpack.c.l.b16 %v199
    %v622 = vunpack.c.h.b16 %v199
    %v623 = vunpack.c.l.b16 %v200
    %v624 = vunpack.c.h.b16 %v200
    %v625 = vunpack.c.l.b16 %v201
    %v626 = vunpack.c.h.b16 %v201
    %v627 = vunpack.c.l.b16 %v202
    %v628 = vunpack.c.h.b16 %v202
    %v629 = vunpack.c.l.b16 %v203
    %v630 = vunpack.c.h.b16 %v203
    %v631 = vunpack.c.l.b16 %v204
    %v632 = vunpack.c.h.b16 %v204
    %v633 = vunpack.c.l.b16 %v205
    %v634 = vunpack.c.h.b16 %v205
    %v635 = vunpack.c.l.b16 %v206
    %v636 = vunpack.c.h.b16 %v206
    %v637 = vunpack.c.l.b16 %v207
    %v638 = vunpack.c.h.b16 %v207
    %v639 = vunpack.c.l.b16 %v208
    %v640 = vunpack.c.h.b16 %v208
    %v641 = vunpack.c.l.b16 %v209
    %v642 = vunpack.c.h.b16 %v209
    %v643 = vunpack.c.l.b16 %v210
    %v644 = vunpack.c.h.b16 %v210
    %v645 = vunpack.c.l.b16 %v211
    %v646 = vunpack.c.h.b16 %v211
    %v647 = vunpack.c.l.b16 %v212
    %v648 = vunpack.c.h.b16 %v212
    %v649 = vunpack.c.l.b16 %v213
    %v650 = vunpack.c.h.b16 %v213
    %v651 = vunpack.c.l.b16 %v214
    %v652 = vunpack.c.h.b16 %v214
    %v653 = vunpack.c.l.b16 %v215
    %v654 = vunpack.c.h.b16 %v215
    %v655 = vunpack.c.l.b16 %v216
    %v656 = vunpack.c.h.b16 %v216
    %v657 = vunpack.c.l.b16 %v217
    %v658 = vunpack.c.h.b16 %v217
    %v659 = vunpack.c.l.b16 %v218
    %v660 = vunpack.c.h.b16 %v218
    %v661 = vunpack.c.l.b16 %v219
    %v662 = vunpack.c.h.b16 %v219
    %v663 = vunpack.c.l.b16 %v220
    %v664 = vunpack.c.h.b16 %v220
    %v665 = vpack.c.b16 %v413, %v409
    %v666 = vpack.c.b16 %v414, %v410
    %v667 = vpack.c.b16 %v415, %v411
    %v668 = vpack.c.b16 %v416, %v412
    %v669 = vpack.c.b16 %v421, %v417
    %v670 = vpack.c.b16 %v422, %v418
    %v671 = vpack.c.b16 %v423, %v419
    %v672 = vpack.c.b16 %v424, %v420
    %v673 = vpack.c.b16 %v429, %v425
    %v674 = vpack.c.b16 %v430, %v426
    %v675 = vpack.c.b16 %v431, %v427
    %v676 = vpack.c.b16 %v432, %v428
    %v677 = vpack.c.b16 %v437, %v433
    %v678 = vpack.c.b16 %v438, %v434
    %v679 = vpack.c.b16 %v439, %v435
    %v680 = vpack.c.b16 %v440, %v436
    %v681 = vpack.c.b16 %v445, %v441
    %v682 = vpack.c.b16 %v446, %v442
    %v683 = vpack.c.b16 %v447, %v443
    %v684 = vpack.c.b16 %v448, %v444
    %v685 = vpack.c.b16 %v453, %v449
    %v686 = vpack.c.b16 %v454, %v450
    %v687 = vpack.c.b16 %v455, %v451
    %v688 = vpack.c.b16 %v456, %v452
    %v689 = vpack.c.b16 %v461, %v457
    %v690 = vpack.c.b16 %v462, %v458
    %v691 = vpack.c.b16 %v463, %v459
    %v692 = vpack.c.b16 %v464, %v460
    %v693 = vpack.c.b16 %v469, %v465
    %v694 = vpack.c.b16 %v470, %v466
    %v695 = vpack.c.b16 %v471, %v467
    %v696 = vpack.c.b16 %v472, %v468
    %v697 = vpack.c.b16 %v477, %v473
    %v698 = vpack.c.b16 %v478, %v474
    %v699 = vpack.c.b16 %v479, %v475
    %v700 = vpack.c.b16 %v480, %v476
    %v701 = vpack.c.b16 %v485, %v481
    %v702 = vpack.c.b16 %v486, %v482
    %v703 = vpack.c.b16 %v487, %v483
    %v704 = vpack.c.b16 %v488, %v484
    %v705 = vpack.c.b16 %v493, %v489
    %v706 = vpack.c.b16 %v494, %v490
    %v707 = vpack.c.b16 %v495, %v491
    %v708 = vpack.c.b16 %v496, %v492
    %v709 = vpack.c.b16 %v501, %v497
    %v710 = vpack.c.b16 %v502, %v498
    %v711 = vpack.c.b16 %v503, %v499
    %v712 = vpack.c.b16 %v504, %v500
    %v713 = vpack.c.b16 %v509, %v505
    %v714 = vpack.c.b16 %v510, %v506
    %v715 = vpack.c.b16 %v511, %v507
    %v716 = vpack.c.b16 %v512, %v508
    %v717 = vpack.c.b16 %v517, %v513
    %v718 = vpack.c.b16 %v518, %v514
    %v719 = vpack.c.b16 %v519, %v515
    %v720 = vpack.c.b16 %v520, %v516
    %v721 = vpack.c.b16 %v525, %v521
    %v722 = vpack.c.b16 %v526, %v522
    %v723 = vpack.c.b16 %v527, %v523
    %v724 = vpack.c.b16 %v528, %v524
    %v725 = vpack.c.b16 %v533, %v529
    %v726 = vpack.c.b16 %v534, %v530
    %v727 = vpack.c.b16 %v535, %v531
    %v728 = vpack.c.b16 %v536, %v532
    %v729 = vpack.c.b16 %v541, %v537
    %v730 = vpack.c.b16 %v542, %v538
    %v731 = vpack.c.b16 %v543, %v539
    %v732 = vpack.c.b16 %v544, %v540
    %v733 = vpack.c.b16 %v549, %v545
    %v734 = vpack.c.b16 %v550, %v546
    %v735 = vpack.c.b16 %v551, %v547
    %v736 = vpack.c.b16 %v552, %v548
    %v737 = vpack.c.b16 %v557, %v553
    %v738 = vpack.c.b16 %v558, %v554
    %v739 = vpack.c.b16 %v559, %v555
    %v740 = vpack.c.b16 %v560, %v556
    %v741 = vpack.c.b16 %v565, %v561
    %v742 = vpack.c.b16 %v566, %v562
    %v743 = vpack.c.b16 %v567, %v563
    %v744 = vpack.c.b16 %v568, %v564
    %v745 = vpack.c.b16 %v573, %v569
    %v746 = vpack.c.b16 %v574, %v570
    %v747 = vpack.c.b16 %v575, %v571
    %v748 = vpack.c.b16 %v576, %v572
    %v749 = vpack.c.b16 %v581, %v577
    %v750 = vpack.c.b16 %v582, %v578
    %v751 = vpack.c.b16 %v583, %v579
    %v752 = vpack.c.b16 %v584, %v580
    %v753 = vpack.c.b16 %v589, %v585
    %v754 = vpack.c.b16 %v590, %v586
    %v755 = vpack.c.b16 %v591, %v587
    %v756 = vpack.c.b16 %v592, %v588
    %v757 = vpack.c.b16 %v597, %v593
    %v758 = vpack.c.b16 %v598, %v594
    %v759 = vpack.c.b16 %v599, %v595
    %v760 = vpack.c.b16 %v600, %v596
    %v761 = vpack.c.b16 %v605, %v601
    %v762 = vpack.c.b16 %v606, %v602
    %v763 = vpack.c.b16 %v607, %v603
    %v764 = vpack.c.b16 %v608, %v604
    %v765 = vpack.c.b16 %v613, %v609
    %v766 = vpack.c.b16 %v614, %v610
    %v767 = vpack.c.b16 %v615, %v611
    %v768 = vpack.c.b16 %v616, %v612
    %v769 = vpack.c.b16 %v621, %v617
    %v770 = vpack.c.b16 %v622, %v618
    %v771 = vpack.c.b16 %v623, %v619
    %v772 = vpack.c.b16 %v624, %v620
    %v773 = vpack.c.b16 %v629, %v625
    %v774 = vpack.c.b16 %v630, %v626
    %v775 = vpack.c.b16 %v631, %v627
    %v776 = vpack.c.b16 %v632, %v628
    %v777 = vpack.c.b16 %v637, %v633
    %v778 = vpack.c.b16 %v638, %v634
    %v779 = vpack.c.b16 %v639, %v635
    %v780 = vpack.c.b16 %v640, %v636
    %v781 = vpack.c.b16 %v645, %v641
    %v782 = vpack.c.b16 %v646, %v642
    %v783 = vpack.c.b16 %v647, %v643
    %v784 = vpack.c.b16 %v648, %v644
    %v785 = vpack.c.b16 %v653, %v649
    %v786 = vpack.c.b16 %v654, %v650
    %v787 = vpack.c.b16 %v655, %v651
    %v788 = vpack.c.b16 %v656, %v652
    %v789 = vpack.c.b16 %v661, %v657
    %v790 = vpack.c.b16 %v662, %v658
    %v791 = vpack.c.b16 %v663, %v659
    %v792 = vpack.c.b16 %v664, %v660
    %921 = vmatprep.subr.bf16.mxu0 %v666
    %922 = vmatpush1.bf16.msra.mxu0 %v665
    %923 = vmatprep.subr.bf16.mxu0 %v670
    %924 = vmatpush1.bf16.msra.mxu0 %v669
    %925 = vmatprep.subr.bf16.mxu0 %v674
    %926 = vmatpush1.bf16.msra.mxu0 %v673
    %927 = vmatprep.subr.bf16.mxu0 %v678
    %928 = vmatpush1.bf16.msra.mxu0 %v677
    %929 = vmatprep.subr.bf16.mxu0 %v682
    %930 = vmatpush1.bf16.msra.mxu0 %v681
    %931 = vmatprep.subr.bf16.mxu0 %v686
    %932 = vmatpush1.bf16.msra.mxu0 %v685
    %933 = vmatprep.subr.bf16.mxu0 %v690
    %934 = vmatpush1.bf16.msra.mxu0 %v689
    %935 = vmatprep.subr.bf16.mxu0 %v694
    %936 = vmatpush1.bf16.msra.mxu0 %v693
    %937 = vmatprep.subr.bf16.mxu0 %v698
    %938 = vmatpush1.bf16.msra.mxu0 %v697
    %939 = vmatprep.subr.bf16.mxu0 %v702
    %940 = vmatpush1.bf16.msra.mxu0 %v701
    %941 = vmatprep.subr.bf16.mxu0 %v706
    %942 = vmatpush1.bf16.msra.mxu0 %v705
    %943 = vmatprep.subr.bf16.mxu0 %v710
    %944 = vmatpush1.bf16.msra.mxu0 %v709
    %945 = vmatprep.subr.bf16.mxu0 %v714
    %946 = vmatpush1.bf16.msra.mxu0 %v713
    %947 = vmatprep.subr.bf16.mxu0 %v718
    %948 = vmatpush1.bf16.msra.mxu0 %v717
    %949 = vmatprep.subr.bf16.mxu0 %v722
    %950 = vmatpush1.bf16.msra.mxu0 %v721
    %951 = vmatprep.subr.bf16.mxu0 %v726
    %952 = vmatpush1.bf16.msra.mxu0 %v725
    %953 = vmatprep.mubr.bf16.mxu0 %v258
    %954 = vmatmul.mubr.bf16.gmra.mrb[0].mxu0 %v257
    %v955 = vpop.f32.mrb[0].mxu0
    %v956 = vadd.f32 0.0, %v955
    %v957 = vpop.f32.mrb[0].mxu0
    %v958 = vadd.f32 0.0, %v957
    %v959 = vpop.f32.mrb[0].mxu0
    %v960 = vadd.f32 0.0, %v959
    %v961 = vpop.f32.mrb[0].mxu0
    %v962 = vadd.f32 0.0, %v961
    %963 = vmatprep.mubr.bf16.mxu0 %v262
    %964 = vmatmul.mubr.bf16.gmra.mrb[0].mxu0 %v261
    %v965 = vpop.f32.mrb[0].mxu0
    %v966 = vadd.f32 0.0, %v965
    %v967 = vpop.f32.mrb[0].mxu0
    %v968 = vadd.f32 0.0, %v967
    %v969 = vpop.f32.mrb[0].mxu0
    %v970 = vadd.f32 0.0, %v969
    %v971 = vpop.f32.mrb[0].mxu0
    %v972 = vadd.f32 0.0, %v971
    %973 = vmatprep.mubr.bf16.mxu0 %v266
    %974 = vmatmul.mubr.bf16.gmra.mrb[0].mxu0 %v265
    %v975 = vpop.f32.mrb[0].mxu0
    %v976 = vadd.f32 0.0, %v975
    %v977 = vpop.f32.mrb[0].mxu0
    %v978 = vadd.f32 0.0, %v977
    %v979 = vpop.f32.mrb[0].mxu0
    %v980 = vadd.f32 0.0, %v979
    %v981 = vpop.f32.mrb[0].mxu0
    %v982 = vadd.f32 0.0, %v981
    %983 = vdwg.mxu0
    %984 = vmatprep.subr.bf16.mxu0 %v730
    %985 = vmatpush1.bf16.msra.mxu0 %v729
    %986 = vmatprep.subr.bf16.mxu0 %v734
    %987 = vmatpush1.bf16.msra.mxu0 %v733
    %988 = vmatprep.subr.bf16.mxu0 %v738
    %989 = vmatpush1.bf16.msra.mxu0 %v737
    %990 = vmatprep.subr.bf16.mxu0 %v742
    %991 = vmatpush1.bf16.msra.mxu0 %v741
    %992 = vmatprep.subr.bf16.mxu0 %v746
    %993 = vmatpush1.bf16.msra.mxu0 %v745
    %994 = vmatprep.subr.bf16.mxu0 %v750
    %995 = vmatpush1.bf16.msra.mxu0 %v749
    %996 = vmatprep.subr.bf16.mxu0 %v754
    %997 = vmatpush1.bf16.msra.mxu0 %v753
    %998 = vmatprep.subr.bf16.mxu0 %v758
    %999 = vmatpush1.bf16.msra.mxu0 %v757
    %1000 = vmatprep.subr.bf16.mxu0 %v762
    %1001 = vmatpush1.bf16.msra.mxu0 %v761
    %1002 = vmatprep.subr.bf16.mxu0 %v766
    %1003 = vmatpush1.bf16.msra.mxu0 %v765
    %1004 = vmatprep.subr.bf16.mxu0 %v770
    %1005 = vmatpush1.bf16.msra.mxu0 %v769
    %1006 = vmatprep.subr.bf16.mxu0 %v774
    %1007 = vmatpush1.bf16.msra.mxu0 %v773
    %1008 = vmatprep.subr.bf16.mxu0 %v778
    %1009 = vmatpush1.bf16.msra.mxu0 %v777
    %1010 = vmatprep.subr.bf16.mxu0 %v782
    %1011 = vmatpush1.bf16.msra.mxu0 %v781
    %1012 = vmatprep.subr.bf16.mxu0 %v786
    %1013 = vmatpush1.bf16.msra.mxu0 %v785
    %1014 = vmatprep.subr.bf16.mxu0 %v790
    %1015 = vmatpush1.bf16.msra.mxu0 %v789
    %1016 = vmatprep.mubr.bf16.mxu0 %v260
    %1017 = vmatmul.mubr.bf16.gmra.mrb[0].mxu0 %v259
    %v1018 = vpop.f32.mrb[0].mxu0
    %v1019 = vadd.f32 %v956, %v1018
    %v1020 = vpop.f32.mrb[0].mxu0
    %v1021 = vadd.f32 %v958, %v1020
    %v1022 = vpop.f32.mrb[0].mxu0
    %v1023 = vadd.f32 %v960, %v1022
    %v1024 = vpop.f32.mrb[0].mxu0
    %v1025 = vadd.f32 %v962, %v1024
    %1026 = vmatprep.mubr.bf16.mxu0 %v264
    %1027 = vmatmul.mubr.bf16.gmra.mrb[0].mxu0 %v263
    %v1028 = vpop.f32.mrb[0].mxu0
    %v1029 = vadd.f32 %v966, %v1028
    %v1030 = vpop.f32.mrb[0].mxu0
    %v1031 = vadd.f32 %v968, %v1030
    %v1032 = vpop.f32.mrb[0].mxu0
    %v1033 = vadd.f32 %v970, %v1032
    %v1034 = vpop.f32.mrb[0].mxu0
    %v1035 = vadd.f32 %v972, %v1034
    %1036 = vmatprep.mubr.bf16.mxu0 %v268
    %1037 = vmatmul.mubr.bf16.gmra.mrb[0].mxu0 %v267
    %v1038 = vpop.f32.mrb[0].mxu0
    %v1039 = vadd.f32 %v976, %v1038
    %v1040 = vpop.f32.mrb[0].mxu0
    %v1041 = vadd.f32 %v978, %v1040
    %v1042 = vpop.f32.mrb[0].mxu0
    %v1043 = vadd.f32 %v980, %v1042
    %v1044 = vpop.f32.mrb[0].mxu0
    %v1045 = vadd.f32 %v982, %v1044
    %1046 = vdwg.mxu0
    %1047 = vmatprep.subr.bf16.mxu0 %v668
    %1048 = vmatpush1.bf16.msra.mxu0 %v667
    %1049 = vmatprep.subr.bf16.mxu0 %v672
    %1050 = vmatpush1.bf16.msra.mxu0 %v671
    %1051 = vmatprep.subr.bf16.mxu0 %v676
    %1052 = vmatpush1.bf16.msra.mxu0 %v675
    %1053 = vmatprep.subr.bf16.mxu0 %v680
    %1054 = vmatpush1.bf16.msra.mxu0 %v679
    %1055 = vmatprep.subr.bf16.mxu0 %v684
    %1056 = vmatpush1.bf16.msra.mxu0 %v683
    %1057 = vmatprep.subr.bf16.mxu0 %v688
    %1058 = vmatpush1.bf16.msra.mxu0 %v687
    %1059 = vmatprep.subr.bf16.mxu0 %v692
    %1060 = vmatpush1.bf16.msra.mxu0 %v691
    %1061 = vmatprep.subr.bf16.mxu0 %v696
    %1062 = vmatpush1.bf16.msra.mxu0 %v695
    %1063 = vmatprep.subr.bf16.mxu0 %v700
    %1064 = vmatpush1.bf16.msra.mxu0 %v699
    %1065 = vmatprep.subr.bf16.mxu0 %v704
    %1066 = vmatpush1.bf16.msra.mxu0 %v703
    %1067 = vmatprep.subr.bf16.mxu0 %v708
    %1068 = vmatpush1.bf16.msra.mxu0 %v707
    %1069 = vmatprep.subr.bf16.mxu0 %v712
    %1070 = vmatpush1.bf16.msra.mxu0 %v711
    %1071 = vmatprep.subr.bf16.mxu0 %v716
    %1072 = vmatpush1.bf16.msra.mxu0 %v715
    %1073 = vmatprep.subr.bf16.mxu0 %v720
    %1074 = vmatpush1.bf16.msra.mxu0 %v719
    %1075 = vmatprep.subr.bf16.mxu0 %v724
    %1076 = vmatpush1.bf16.msra.mxu0 %v723
    %1077 = vmatprep.subr.bf16.mxu0 %v728
    %1078 = vmatpush1.bf16.msra.mxu0 %v727
    %1079 = vmatprep.mubr.bf16.mxu0 %v258
    %1080 = vmatmul.mubr.bf16.gmra.mrb[0].mxu0 %v257
    %v1081 = vpop.f32.mrb[0].mxu0
    %v1082 = vadd.f32 0.0, %v1081
    %v1083 = vpop.f32.mrb[0].mxu0
    %v1084 = vadd.f32 0.0, %v1083
    %v1085 = vpop.f32.mrb[0].mxu0
    %v1086 = vadd.f32 0.0, %v1085
    %v1087 = vpop.f32.mrb[0].mxu0
    %v1088 = vadd.f32 0.0, %v1087
    %1089 = vmatprep.mubr.bf16.mxu0 %v262
    %1090 = vmatmul.mubr.bf16.gmra.mrb[0].mxu0 %v261
    %v1091 = vpop.f32.mrb[0].mxu0
    %v1092 = vadd.f32 0.0, %v1091
    %v1093 = vpop.f32.mrb[0].mxu0
    %v1094 = vadd.f32 0.0, %v1093
    %v1095 = vpop.f32.mrb[0].mxu0
    %v1096 = vadd.f32 0.0, %v1095
    %v1097 = vpop.f32.mrb[0].mxu0
    %v1098 = vadd.f32 0.0, %v1097
    %1099 = vmatprep.mubr.bf16.mxu0 %v266
    %1100 = vmatmul.mubr.bf16.gmra.mrb[0].mxu0 %v265
    %v1101 = vpop.f32.mrb[0].mxu0
    %v1102 = vadd.f32 0.0, %v1101
    %v1103 = vpop.f32.mrb[0].mxu0
    %v1104 = vadd.f32 0.0, %v1103
    %v1105 = vpop.f32.mrb[0].mxu0
    %v1106 = vadd.f32 0.0, %v1105
    %v1107 = vpop.f32.mrb[0].mxu0
    %v1108 = vadd.f32 0.0, %v1107
    %1109 = vdwg.mxu0
    %1110 = vmatprep.subr.bf16.mxu0 %v732
    %1111 = vmatpush1.bf16.msra.mxu0 %v731
    %1112 = vmatprep.subr.bf16.mxu0 %v736
    %1113 = vmatpush1.bf16.msra.mxu0 %v735
    %1114 = vmatprep.subr.bf16.mxu0 %v740
    %1115 = vmatpush1.bf16.msra.mxu0 %v739
    %1116 = vmatprep.subr.bf16.mxu0 %v744
    %1117 = vmatpush1.bf16.msra.mxu0 %v743
    %1118 = vmatprep.subr.bf16.mxu0 %v748
    %1119 = vmatpush1.bf16.msra.mxu0 %v747
    %1120 = vmatprep.subr.bf16.mxu0 %v752
    %1121 = vmatpush1.bf16.msra.mxu0 %v751
    %1122 = vmatprep.subr.bf16.mxu0 %v756
    %1123 = vmatpush1.bf16.msra.mxu0 %v755
    %1124 = vmatprep.subr.bf16.mxu0 %v760
    %1125 = vmatpush1.bf16.msra.mxu0 %v759
    %1126 = vmatprep.subr.bf16.mxu0 %v764
    %1127 = vmatpush1.bf16.msra.mxu0 %v763
    %1128 = vmatprep.subr.bf16.mxu0 %v768
    %1129 = vmatpush1.bf16.msra.mxu0 %v767
    %1130 = vmatprep.subr.bf16.mxu0 %v772
    %1131 = vmatpush1.bf16.msra.mxu0 %v771
    %1132 = vmatprep.subr.bf16.mxu0 %v776
    %1133 = vmatpush1.bf16.msra.mxu0 %v775
    %1134 = vmatprep.subr.bf16.mxu0 %v780
    %1135 = vmatpush1.bf16.msra.mxu0 %v779
    %1136 = vmatprep.subr.bf16.mxu0 %v784
    %1137 = vmatpush1.bf16.msra.mxu0 %v783
    %1138 = vmatprep.subr.bf16.mxu0 %v788
    %1139 = vmatpush1.bf16.msra.mxu0 %v787
    %1140 = vmatprep.subr.bf16.mxu0 %v792
    %1141 = vmatpush1.bf16.msra.mxu0 %v791
    %1142 = vmatprep.mubr.bf16.mxu0 %v260
    %1143 = vmatmul.mubr.bf16.gmra.mrb[0].mxu0 %v259
    %v1144 = vpop.f32.mrb[0].mxu0
    %v1145 = vadd.f32 %v1082, %v1144
    %v1146 = vpop.f32.mrb[0].mxu0
    %v1147 = vadd.f32 %v1084, %v1146
    %v1148 = vpop.f32.mrb[0].mxu0
    %v1149 = vadd.f32 %v1086, %v1148
    %v1150 = vpop.f32.mrb[0].mxu0
    %v1151 = vadd.f32 %v1088, %v1150
    %1152 = vmatprep.mubr.bf16.mxu0 %v264
    %1153 = vmatmul.mubr.bf16.gmra.mrb[0].mxu0 %v263
    %v1154 = vpop.f32.mrb[0].mxu0
    %v1155 = vadd.f32 %v1092, %v1154
    %v1156 = vpop.f32.mrb[0].mxu0
    %v1157 = vadd.f32 %v1094, %v1156
    %v1158 = vpop.f32.mrb[0].mxu0
    %v1159 = vadd.f32 %v1096, %v1158
    %v1160 = vpop.f32.mrb[0].mxu0
    %v1161 = vadd.f32 %v1098, %v1160
    %1162 = vmatprep.mubr.bf16.mxu0 %v268
    %1163 = vmatmul.mubr.bf16.gmra.mrb[0].mxu0 %v267
    %v1164 = vpop.f32.mrb[0].mxu0
    %v1165 = vadd.f32 %v1102, %v1164
    %v1166 = vpop.f32.mrb[0].mxu0
    %v1167 = vadd.f32 %v1104, %v1166
    %v1168 = vpop.f32.mrb[0].mxu0
    %v1169 = vadd.f32 %v1106, %v1168
    %v1170 = vpop.f32.mrb[0].mxu0
    %v1171 = vadd.f32 %v1108, %v1170
    %1172 = vdwg.mxu0
    %v1173 = vmul.f32 %v1019, %v1019
    %v1174 = vmul.f32 %v1021, %v1021
    %v1175 = vmul.f32 %v1145, %v1145
    %v1176 = vmul.f32 %v1147, %v1147
    %v1177 = vmul.f32 %v1023, %v1023
    %v1178 = vmul.f32 %v1025, %v1025
    %v1179 = vmul.f32 %v1149, %v1149
    %v1180 = vmul.f32 %v1151, %v1151
    %v1181 = vmul.f32 %v1029, %v1029
    %v1182 = vmul.f32 %v1031, %v1031
    %v1183 = vmul.f32 %v1155, %v1155
    %v1184 = vmul.f32 %v1157, %v1157
    %v1185 = vmul.f32 %v1033, %v1033
    %v1186 = vmul.f32 %v1035, %v1035
    %v1187 = vmul.f32 %v1159, %v1159
    %v1188 = vmul.f32 %v1161, %v1161
    %v1189 = vmul.f32 %v1039, %v1039
    %v1190 = vmul.f32 %v1041, %v1041
    %v1191 = vmul.f32 %v1165, %v1165
    %v1192 = vmul.f32 %v1167, %v1167
    %v1193 = vmul.f32 %v1043, %v1043
    %v1194 = vmul.f32 %v1045, %v1045
    %v1195 = vmul.f32 %v1169, %v1169
    %v1196 = vmul.f32 %v1171, %v1171
    %v1197 = vlaneseq
    %v1198 = vand.u32 %v1197, 127
    %v1199 = vadd.s32 %v1198, 128
    %v1200 = vadd.s32 %v1198, 256
    %v1201 = vadd.s32 %v1198, 384
    %vm1202 = vcmp.ne.s32.totalorder %v1198, 0
    %vm1203 = vcmp.ne.s32.totalorder %v1199, 0
    %vm1204 = vcmp.ne.s32.totalorder %v1200, 0
    %vm1205 = vcmp.ne.s32.totalorder %v1201, 0
    %vm1206 = vcmp.ne.s32.totalorder %v1198, 256
    %vm1207 = vcmp.ne.s32.totalorder %v1199, 256
    %vm1208 = vcmp.ne.s32.totalorder %v1200, 256
    %vm1209 = vcmp.ne.s32.totalorder %v1201, 256
    %vm1210 = vmand %vm1202, %vm1206
    %vm1211 = vmand %vm1203, %vm1207
    %vm1212 = vmand %vm1204, %vm1208
    %vm1213 = vmand %vm1205, %vm1209
    %v1214 = vsel %vm1210, 1, 0
    %v1215 = vsel %vm1211, 1, 0
    %v1216 = vsel %vm1212, 1, 0
    %v1217 = vsel %vm1213, 1, 0
    %vm1218 = vcmp.eq.s32.totalorder %v1214, 1
    %vm1219 = vcmp.eq.s32.totalorder %v1215, 1
    %vm1220 = vcmp.eq.s32.totalorder %v1216, 1
    %vm1221 = vcmp.eq.s32.totalorder %v1217, 1
    %v1222 = vsel %vm1218, %v1175, 0.0
    %v1223 = vsel %vm1219, %v1176, 0.0
    %v1224 = vsel %vm1220, %v1173, 0.0
    %v1225 = vsel %vm1221, %v1174, 0.0
    %v1226 = vsel %vm1218, %v1179, 0.0
    %v1227 = vsel %vm1219, %v1180, 0.0
    %v1228 = vsel %vm1220, %v1177, 0.0
    %v1229 = vsel %vm1221, %v1178, 0.0
    %v1230 = vsel %vm1218, %v1183, 0.0
    %v1231 = vsel %vm1219, %v1184, 0.0
    %v1232 = vsel %vm1220, %v1181, 0.0
    %v1233 = vsel %vm1221, %v1182, 0.0
    %v1234 = vsel %vm1218, %v1187, 0.0
    %v1235 = vsel %vm1219, %v1188, 0.0
    %v1236 = vsel %vm1220, %v1185, 0.0
    %v1237 = vsel %vm1221, %v1186, 0.0
    %v1238 = vsel %vm1218, %v1191, 0.0
    %v1239 = vsel %vm1219, %v1192, 0.0
    %v1240 = vsel %vm1220, %v1189, 0.0
    %v1241 = vsel %vm1221, %v1190, 0.0
    %v1242 = vsel %vm1218, %v1195, 0.0
    %v1243 = vsel %vm1219, %v1196, 0.0
    %v1244 = vsel %vm1220, %v1193, 0.0
    %v1245 = vsel %vm1221, %v1194, 0.0
    %v1246 = vadd.f32 %v1173, %v1222
    %v1247 = vadd.f32 %v1174, %v1223
    %v1248 = vadd.f32 %v1175, %v1224
    %v1249 = vadd.f32 %v1176, %v1225
    %v1250 = vadd.f32 %v1177, %v1226
    %v1251 = vadd.f32 %v1178, %v1227
    %v1252 = vadd.f32 %v1179, %v1228
    %v1253 = vadd.f32 %v1180, %v1229
    %v1254 = vadd.f32 %v1181, %v1230
    %v1255 = vadd.f32 %v1182, %v1231
    %v1256 = vadd.f32 %v1183, %v1232
    %v1257 = vadd.f32 %v1184, %v1233
    %v1258 = vadd.f32 %v1185, %v1234
    %v1259 = vadd.f32 %v1186, %v1235
    %v1260 = vadd.f32 %v1187, %v1236
    %v1261 = vadd.f32 %v1188, %v1237
    %v1262 = vadd.f32 %v1189, %v1238
    %v1263 = vadd.f32 %v1190, %v1239
    %v1264 = vadd.f32 %v1191, %v1240
    %v1265 = vadd.f32 %v1192, %v1241
    %v1266 = vadd.f32 %v1193, %v1242
    %v1267 = vadd.f32 %v1194, %v1243
    %v1268 = vadd.f32 %v1195, %v1244
    %v1269 = vadd.f32 %v1196, %v1245
    %v1270 = vadd.f32 %v1246, 1.1754944e-38
    %v1271 = vadd.f32 %v1247, 1.1754944e-38
    %v1272 = vadd.f32 %v1248, 1.1754944e-38
    %v1273 = vadd.f32 %v1249, 1.1754944e-38
    %v1274 = vadd.f32 %v1250, 1.1754944e-38
    %v1275 = vadd.f32 %v1251, 1.1754944e-38
    %v1276 = vadd.f32 %v1252, 1.1754944e-38
    %v1277 = vadd.f32 %v1253, 1.1754944e-38
    %v1278 = vadd.f32 %v1254, 1.1754944e-38
    %v1279 = vadd.f32 %v1255, 1.1754944e-38
    %v1280 = vadd.f32 %v1256, 1.1754944e-38
    %v1281 = vadd.f32 %v1257, 1.1754944e-38
    %v1282 = vadd.f32 %v1258, 1.1754944e-38
    %v1283 = vadd.f32 %v1259, 1.1754944e-38
    %v1284 = vadd.f32 %v1260, 1.1754944e-38
    %v1285 = vadd.f32 %v1261, 1.1754944e-38
    %v1286 = vadd.f32 %v1262, 1.1754944e-38
    %v1287 = vadd.f32 %v1263, 1.1754944e-38
    %v1288 = vadd.f32 %v1264, 1.1754944e-38
    %v1289 = vadd.f32 %v1265, 1.1754944e-38
    %v1290 = vadd.f32 %v1266, 1.1754944e-38
    %v1291 = vadd.f32 %v1267, 1.1754944e-38
    %v1292 = vadd.f32 %v1268, 1.1754944e-38
    %v1293 = vadd.f32 %v1269, 1.1754944e-38
    %v1294 = vrsqrt.pop %v1270
    %v1295 = vrsqrt.pop %v1271
    %v1296 = vrsqrt.pop %v1272
    %v1297 = vrsqrt.pop %v1273
    %v1298 = vrsqrt.pop %v1274
    %v1299 = vrsqrt.pop %v1275
    %v1300 = vrsqrt.pop %v1276
    %v1301 = vrsqrt.pop %v1277
    %v1302 = vrsqrt.pop %v1278
    %v1303 = vrsqrt.pop %v1279
    %v1304 = vrsqrt.pop %v1280
    %v1305 = vrsqrt.pop %v1281
    %v1306 = vrsqrt.pop %v1282
    %v1307 = vrsqrt.pop %v1283
    %v1308 = vrsqrt.pop %v1284
    %v1309 = vrsqrt.pop %v1285
    %v1310 = vrsqrt.pop %v1286
    %v1311 = vrsqrt.pop %v1287
    %v1312 = vrsqrt.pop %v1288
    %v1313 = vrsqrt.pop %v1289
    %v1314 = vrsqrt.pop %v1290
    %v1315 = vrsqrt.pop %v1291
    %v1316 = vrsqrt.pop %v1292
    %v1317 = vrsqrt.pop %v1293
    %v1318 = vmul.f32 %v1246, %v1294
    %v1319 = vmul.f32 %v1247, %v1295
    %v1320 = vmul.f32 %v1248, %v1296
    %v1321 = vmul.f32 %v1249, %v1297
    %v1322 = vmul.f32 %v1250, %v1298
    %v1323 = vmul.f32 %v1251, %v1299
    %v1324 = vmul.f32 %v1252, %v1300
    %v1325 = vmul.f32 %v1253, %v1301
    %v1326 = vmul.f32 %v1254, %v1302
    %v1327 = vmul.f32 %v1255, %v1303
    %v1328 = vmul.f32 %v1256, %v1304
    %v1329 = vmul.f32 %v1257, %v1305
    %v1330 = vmul.f32 %v1258, %v1306
    %v1331 = vmul.f32 %v1259, %v1307
    %v1332 = vmul.f32 %v1260, %v1308
    %v1333 = vmul.f32 %v1261, %v1309
    %v1334 = vmul.f32 %v1262, %v1310
    %v1335 = vmul.f32 %v1263, %v1311
    %v1336 = vmul.f32 %v1264, %v1312
    %v1337 = vmul.f32 %v1265, %v1313
    %v1338 = vmul.f32 %v1266, %v1314
    %v1339 = vmul.f32 %v1267, %v1315
    %v1340 = vmul.f32 %v1268, %v1316
    %v1341 = vmul.f32 %v1269, %v1317
    %v1342 = vld [vmem:[%s4] sm:$0xf]
    %v1343 = vstv %s80
    %v1344 = vmul.f32 %v1342, %v1343
    %v1346 = vlaneseq
    %v1347 = vshrl.u32 %v1346, 7
    %v1348 = vsub.s32 0, %v1347
    %v1349 = vrot.slane %v1344, %v1348
    %v1350 = vlaneseq
    %v1351 = vshrl.u32 %v1350, 7
    %v1352 = vsub.s32 1, %v1351
    %v1353 = vrot.slane %v1344, %v1352
    %v1354 = vlaneseq
    %v1355 = vshrl.u32 %v1354, 7
    %v1356 = vsub.s32 2, %v1355
    %v1357 = vrot.slane %v1344, %v1356
    %v1358 = vlaneseq
    %v1359 = vshrl.u32 %v1358, 7
    %v1360 = vsub.s32 3, %v1359
    %v1361 = vrot.slane %v1344, %v1360
    %v1366 = vsub.f32 %v1318, %v1349
    %v1367 = vsub.f32 %v1319, %v1353
    %v1368 = vsub.f32 %v1320, %v1357
    %v1369 = vsub.f32 %v1321, %v1361
    %v1370 = vsub.f32 %v1322, %v1349
    %v1371 = vsub.f32 %v1323, %v1353
    %v1372 = vsub.f32 %v1324, %v1357
    %v1373 = vsub.f32 %v1325, %v1361
    %v1374 = vsub.f32 %v1326, %v1349
    %v1375 = vsub.f32 %v1327, %v1353
    %v1376 = vsub.f32 %v1328, %v1357
    %v1377 = vsub.f32 %v1329, %v1361
    %v1378 = vsub.f32 %v1330, %v1349
    %v1379 = vsub.f32 %v1331, %v1353
    %v1380 = vsub.f32 %v1332, %v1357
    %v1381 = vsub.f32 %v1333, %v1361
    %v1382 = vsub.f32 %v1334, %v1349
    %v1383 = vsub.f32 %v1335, %v1353
    %v1384 = vsub.f32 %v1336, %v1357
    %v1385 = vsub.f32 %v1337, %v1361
    %v1386 = vsub.f32 %v1338, %v1349
    %v1387 = vsub.f32 %v1339, %v1353
    %v1388 = vsub.f32 %v1340, %v1357
    %v1389 = vsub.f32 %v1341, %v1361
    %v1390 = vmax.f32 %v1366, 0.0
    %v1391 = vmax.f32 %v1367, 0.0
    %v1392 = vmax.f32 %v1368, 0.0
    %v1393 = vmax.f32 %v1369, 0.0
    %v1394 = vmax.f32 %v1370, 0.0
    %v1395 = vmax.f32 %v1371, 0.0
    %v1396 = vmax.f32 %v1372, 0.0
    %v1397 = vmax.f32 %v1373, 0.0
    %v1398 = vmax.f32 %v1374, 0.0
    %v1399 = vmax.f32 %v1375, 0.0
    %v1400 = vmax.f32 %v1376, 0.0
    %v1401 = vmax.f32 %v1377, 0.0
    %v1402 = vmax.f32 %v1378, 0.0
    %v1403 = vmax.f32 %v1379, 0.0
    %v1404 = vmax.f32 %v1380, 0.0
    %v1405 = vmax.f32 %v1381, 0.0
    %v1406 = vmax.f32 %v1382, 0.0
    %v1407 = vmax.f32 %v1383, 0.0
    %v1408 = vmax.f32 %v1384, 0.0
    %v1409 = vmax.f32 %v1385, 0.0
    %v1410 = vmax.f32 %v1386, 0.0
    %v1411 = vmax.f32 %v1387, 0.0
    %v1412 = vmax.f32 %v1388, 0.0
    %v1413 = vmax.f32 %v1389, 0.0
    %v1414 = vmul.f32 %v1390, %v1294
    %v1415 = vmul.f32 %v1391, %v1295
    %v1416 = vmul.f32 %v1392, %v1296
    %v1417 = vmul.f32 %v1393, %v1297
    %v1418 = vmul.f32 %v1394, %v1298
    %v1419 = vmul.f32 %v1395, %v1299
    %v1420 = vmul.f32 %v1396, %v1300
    %v1421 = vmul.f32 %v1397, %v1301
    %v1422 = vmul.f32 %v1398, %v1302
    %v1423 = vmul.f32 %v1399, %v1303
    %v1424 = vmul.f32 %v1400, %v1304
    %v1425 = vmul.f32 %v1401, %v1305
    %v1426 = vmul.f32 %v1402, %v1306
    %v1427 = vmul.f32 %v1403, %v1307
    %v1428 = vmul.f32 %v1404, %v1308
    %v1429 = vmul.f32 %v1405, %v1309
    %v1430 = vmul.f32 %v1406, %v1310
    %v1431 = vmul.f32 %v1407, %v1311
    %v1432 = vmul.f32 %v1408, %v1312
    %v1433 = vmul.f32 %v1409, %v1313
    %v1434 = vmul.f32 %v1410, %v1314
    %v1435 = vmul.f32 %v1411, %v1315
    %v1436 = vmul.f32 %v1412, %v1316
    %v1437 = vmul.f32 %v1413, %v1317
    %v1438 = vmul.f32 %v1019, %v1414
    %v1439 = vmul.f32 %v1021, %v1415
    %v1440 = vmul.f32 %v1145, %v1416
    %v1441 = vmul.f32 %v1147, %v1417
    %v1442 = vmul.f32 %v1023, %v1418
    %v1443 = vmul.f32 %v1025, %v1419
    %v1444 = vmul.f32 %v1149, %v1420
    %v1445 = vmul.f32 %v1151, %v1421
    %v1446 = vmul.f32 %v1029, %v1422
    %v1447 = vmul.f32 %v1031, %v1423
    %v1448 = vmul.f32 %v1155, %v1424
    %v1449 = vmul.f32 %v1157, %v1425
    %v1450 = vmul.f32 %v1033, %v1426
    %v1451 = vmul.f32 %v1035, %v1427
    %v1452 = vmul.f32 %v1159, %v1428
    %v1453 = vmul.f32 %v1161, %v1429
    %v1454 = vmul.f32 %v1039, %v1430
    %v1455 = vmul.f32 %v1041, %v1431
    %v1456 = vmul.f32 %v1165, %v1432
    %v1457 = vmul.f32 %v1167, %v1433
    %v1458 = vmul.f32 %v1043, %v1434
    %v1459 = vmul.f32 %v1045, %v1435
    %v1460 = vmul.f32 %v1169, %v1436
    %v1461 = vmul.f32 %v1171, %v1437
    %v1462 = vpack.c.bf16 %v1442, %v1438
    %v1463 = vpack.c.bf16 %v1443, %v1439
    %v1464 = vpack.c.bf16 %v1444, %v1440
    %v1465 = vpack.c.bf16 %v1445, %v1441
    %v1466 = vpack.c.bf16 %v1450, %v1446
    %v1467 = vpack.c.bf16 %v1451, %v1447
    %v1468 = vpack.c.bf16 %v1452, %v1448
    %v1469 = vpack.c.bf16 %v1453, %v1449
    %v1470 = vpack.c.bf16 %v1458, %v1454
    %v1471 = vpack.c.bf16 %v1459, %v1455
    %v1472 = vpack.c.bf16 %v1460, %v1456
    %v1473 = vpack.c.bf16 %v1461, %v1457
    %v1474 = vld [vmem:[#allocation8] sm:$0xff]
    %v1475 = vld [vmem:[#allocation8 + $0x8] sm:$0xff]
    %v1476 = vld [vmem:[#allocation8 + $0x10] sm:$0xff]
    %v1477 = vld [vmem:[#allocation8 + $0x18] sm:$0xff]
    %v1478 = vld [vmem:[#allocation8 + $0x20] sm:$0xff]
    %v1479 = vld [vmem:[#allocation8 + $0x28] sm:$0xff]
    %v1480 = vld [vmem:[#allocation8 + $0x30] sm:$0xff]
    %v1481 = vld [vmem:[#allocation8 + $0x38] sm:$0xff]
    %v1482 = vld [vmem:[#allocation8 + $0x40] sm:$0xff]
    %v1483 = vld [vmem:[#allocation8 + $0x48] sm:$0xff]
    %v1484 = vld [vmem:[#allocation8 + $0x50] sm:$0xff]
    %v1485 = vld [vmem:[#allocation8 + $0x58] sm:$0xff]
    %v1486 = vld [vmem:[#allocation8 + $0x60] sm:$0xff]
    %v1487 = vld [vmem:[#allocation8 + $0x68] sm:$0xff]
    %v1488 = vld [vmem:[#allocation8 + $0x70] sm:$0xff]
    %v1489 = vld [vmem:[#allocation8 + $0x78] sm:$0xff]
    %v1490 = vld [vmem:[#allocation8 + $0x80] sm:$0xff]
    %v1491 = vld [vmem:[#allocation8 + $0x88] sm:$0xff]
    %v1492 = vld [vmem:[#allocation8 + $0x90] sm:$0xff]
    %v1493 = vld [vmem:[#allocation8 + $0x98] sm:$0xff]
    %v1494 = vld [vmem:[#allocation8 + $0xa0] sm:$0xff]
    %v1495 = vld [vmem:[#allocation8 + $0xa8] sm:$0xff]
    %v1496 = vld [vmem:[#allocation8 + $0xb0] sm:$0xff]
    %v1497 = vld [vmem:[#allocation8 + $0xb8] sm:$0xff]
    %v1498 = vld [vmem:[#allocation8 + $0xc0] sm:$0xff]
    %v1499 = vld [vmem:[#allocation8 + $0xc8] sm:$0xff]
    %v1500 = vld [vmem:[#allocation8 + $0xd0] sm:$0xff]
    %v1501 = vld [vmem:[#allocation8 + $0xd8] sm:$0xff]
    %v1502 = vld [vmem:[#allocation8 + $0xe0] sm:$0xff]
    %v1503 = vld [vmem:[#allocation8 + $0xe8] sm:$0xff]
    %v1504 = vld [vmem:[#allocation8 + $0xf0] sm:$0xff]
    %v1505 = vld [vmem:[#allocation8 + $0xf8] sm:$0xff]
    %v1506 = vld [vmem:[#allocation8 + $0x100] sm:$0xff]
    %v1507 = vld [vmem:[#allocation8 + $0x108] sm:$0xff]
    %v1508 = vld [vmem:[#allocation8 + $0x110] sm:$0xff]
    %v1509 = vld [vmem:[#allocation8 + $0x118] sm:$0xff]
    %v1510 = vld [vmem:[#allocation8 + $0x120] sm:$0xff]
    %v1511 = vld [vmem:[#allocation8 + $0x128] sm:$0xff]
    %v1512 = vld [vmem:[#allocation8 + $0x130] sm:$0xff]
    %v1513 = vld [vmem:[#allocation8 + $0x138] sm:$0xff]
    %v1514 = vld [vmem:[#allocation8 + $0x140] sm:$0xff]
    %v1515 = vld [vmem:[#allocation8 + $0x148] sm:$0xff]
    %v1516 = vld [vmem:[#allocation8 + $0x150] sm:$0xff]
    %v1517 = vld [vmem:[#allocation8 + $0x158] sm:$0xff]
    %v1518 = vld [vmem:[#allocation8 + $0x160] sm:$0xff]
    %v1519 = vld [vmem:[#allocation8 + $0x168] sm:$0xff]
    %v1520 = vld [vmem:[#allocation8 + $0x170] sm:$0xff]
    %v1521 = vld [vmem:[#allocation8 + $0x178] sm:$0xff]
    %v1522 = vld [vmem:[#allocation8 + $0x180] sm:$0xff]
    %v1523 = vld [vmem:[#allocation8 + $0x188] sm:$0xff]
    %v1524 = vld [vmem:[#allocation8 + $0x190] sm:$0xff]
    %v1525 = vld [vmem:[#allocation8 + $0x198] sm:$0xff]
    %v1526 = vld [vmem:[#allocation8 + $0x1a0] sm:$0xff]
    %v1527 = vld [vmem:[#allocation8 + $0x1a8] sm:$0xff]
    %v1528 = vld [vmem:[#allocation8 + $0x1b0] sm:$0xff]
    %v1529 = vld [vmem:[#allocation8 + $0x1b8] sm:$0xff]
    %v1530 = vld [vmem:[#allocation8 + $0x1c0] sm:$0xff]
    %v1531 = vld [vmem:[#allocation8 + $0x1c8] sm:$0xff]
    %v1532 = vld [vmem:[#allocation8 + $0x1d0] sm:$0xff]
    %v1533 = vld [vmem:[#allocation8 + $0x1d8] sm:$0xff]
    %v1534 = vld [vmem:[#allocation8 + $0x1e0] sm:$0xff]
    %v1535 = vld [vmem:[#allocation8 + $0x1e8] sm:$0xff]
    %v1536 = vld [vmem:[#allocation8 + $0x1f0] sm:$0xff]
    %v1537 = vld [vmem:[#allocation8 + $0x1f8] sm:$0xff]
    %v1538 = vld [vmem:[#allocation8 + $0x200] sm:$0xff]
    %v1539 = vld [vmem:[#allocation8 + $0x208] sm:$0xff]
    %v1540 = vld [vmem:[#allocation8 + $0x210] sm:$0xff]
    %v1541 = vld [vmem:[#allocation8 + $0x218] sm:$0xff]
    %v1542 = vld [vmem:[#allocation8 + $0x220] sm:$0xff]
    %v1543 = vld [vmem:[#allocation8 + $0x228] sm:$0xff]
    %v1544 = vld [vmem:[#allocation8 + $0x230] sm:$0xff]
    %v1545 = vld [vmem:[#allocation8 + $0x238] sm:$0xff]
    %v1546 = vld [vmem:[#allocation8 + $0x240] sm:$0xff]
    %v1547 = vld [vmem:[#allocation8 + $0x248] sm:$0xff]
    %v1548 = vld [vmem:[#allocation8 + $0x250] sm:$0xff]
    %v1549 = vld [vmem:[#allocation8 + $0x258] sm:$0xff]
    %v1550 = vld [vmem:[#allocation8 + $0x260] sm:$0xff]
    %v1551 = vld [vmem:[#allocation8 + $0x268] sm:$0xff]
    %v1552 = vld [vmem:[#allocation8 + $0x270] sm:$0xff]
    %v1553 = vld [vmem:[#allocation8 + $0x278] sm:$0xff]
    %v1554 = vld [vmem:[#allocation8 + $0x280] sm:$0xff]
    %v1555 = vld [vmem:[#allocation8 + $0x288] sm:$0xff]
    %v1556 = vld [vmem:[#allocation8 + $0x290] sm:$0xff]
    %v1557 = vld [vmem:[#allocation8 + $0x298] sm:$0xff]
    %v1558 = vld [vmem:[#allocation8 + $0x2a0] sm:$0xff]
    %v1559 = vld [vmem:[#allocation8 + $0x2a8] sm:$0xff]
    %v1560 = vld [vmem:[#allocation8 + $0x2b0] sm:$0xff]
    %v1561 = vld [vmem:[#allocation8 + $0x2b8] sm:$0xff]
    %v1562 = vld [vmem:[#allocation8 + $0x2c0] sm:$0xff]
    %v1563 = vld [vmem:[#allocation8 + $0x2c8] sm:$0xff]
    %v1564 = vld [vmem:[#allocation8 + $0x2d0] sm:$0xff]
    %v1565 = vld [vmem:[#allocation8 + $0x2d8] sm:$0xff]
    %v1566 = vld [vmem:[#allocation8 + $0x2e0] sm:$0xff]
    %v1567 = vld [vmem:[#allocation8 + $0x2e8] sm:$0xff]
    %v1568 = vld [vmem:[#allocation8 + $0x2f0] sm:$0xff]
    %v1569 = vld [vmem:[#allocation8 + $0x2f8] sm:$0xff]
    %v1570 = vld [vmem:[#allocation8 + $0x300] sm:$0xff]
    %v1571 = vld [vmem:[#allocation8 + $0x308] sm:$0xff]
    %v1572 = vld [vmem:[#allocation8 + $0x310] sm:$0xff]
    %v1573 = vld [vmem:[#allocation8 + $0x318] sm:$0xff]
    %v1574 = vld [vmem:[#allocation8 + $0x320] sm:$0xff]
    %v1575 = vld [vmem:[#allocation8 + $0x328] sm:$0xff]
    %v1576 = vld [vmem:[#allocation8 + $0x330] sm:$0xff]
    %v1577 = vld [vmem:[#allocation8 + $0x338] sm:$0xff]
    %v1578 = vld [vmem:[#allocation8 + $0x340] sm:$0xff]
    %v1579 = vld [vmem:[#allocation8 + $0x348] sm:$0xff]
    %v1580 = vld [vmem:[#allocation8 + $0x350] sm:$0xff]
    %v1581 = vld [vmem:[#allocation8 + $0x358] sm:$0xff]
    %v1582 = vld [vmem:[#allocation8 + $0x360] sm:$0xff]
    %v1583 = vld [vmem:[#allocation8 + $0x368] sm:$0xff]
    %v1584 = vld [vmem:[#allocation8 + $0x370] sm:$0xff]
    %v1585 = vld [vmem:[#allocation8 + $0x378] sm:$0xff]
    %v1586 = vld [vmem:[#allocation8 + $0x380] sm:$0xff]
    %v1587 = vld [vmem:[#allocation8 + $0x388] sm:$0xff]
    %v1588 = vld [vmem:[#allocation8 + $0x390] sm:$0xff]
    %v1589 = vld [vmem:[#allocation8 + $0x398] sm:$0xff]
    %v1590 = vld [vmem:[#allocation8 + $0x3a0] sm:$0xff]
    %v1591 = vld [vmem:[#allocation8 + $0x3a8] sm:$0xff]
    %v1592 = vld [vmem:[#allocation8 + $0x3b0] sm:$0xff]
    %v1593 = vld [vmem:[#allocation8 + $0x3b8] sm:$0xff]
    %v1594 = vld [vmem:[#allocation8 + $0x3c0] sm:$0xff]
    %v1595 = vld [vmem:[#allocation8 + $0x3c8] sm:$0xff]
    %v1596 = vld [vmem:[#allocation8 + $0x3d0] sm:$0xff]
    %v1597 = vld [vmem:[#allocation8 + $0x3d8] sm:$0xff]
    %v1598 = vld [vmem:[#allocation8 + $0x3e0] sm:$0xff]
    %v1599 = vld [vmem:[#allocation8 + $0x3e8] sm:$0xff]
    %v1600 = vld [vmem:[#allocation8 + $0x3f0] sm:$0xff]
    %v1601 = vld [vmem:[#allocation8 + $0x3f8] sm:$0xff]
    %v1730 = vunpack.c.l.b16 %v1474
    %v1731 = vunpack.c.h.b16 %v1474
    %v1732 = vunpack.c.l.b16 %v1475
    %v1733 = vunpack.c.h.b16 %v1475
    %v1734 = vunpack.c.l.b16 %v1476
    %v1735 = vunpack.c.h.b16 %v1476
    %v1736 = vunpack.c.l.b16 %v1477
    %v1737 = vunpack.c.h.b16 %v1477
    %v1738 = vunpack.c.l.b16 %v1478
    %v1739 = vunpack.c.h.b16 %v1478
    %v1740 = vunpack.c.l.b16 %v1479
    %v1741 = vunpack.c.h.b16 %v1479
    %v1742 = vunpack.c.l.b16 %v1480
    %v1743 = vunpack.c.h.b16 %v1480
    %v1744 = vunpack.c.l.b16 %v1481
    %v1745 = vunpack.c.h.b16 %v1481
    %v1746 = vunpack.c.l.b16 %v1482
    %v1747 = vunpack.c.h.b16 %v1482
    %v1748 = vunpack.c.l.b16 %v1483
    %v1749 = vunpack.c.h.b16 %v1483
    %v1750 = vunpack.c.l.b16 %v1484
    %v1751 = vunpack.c.h.b16 %v1484
    %v1752 = vunpack.c.l.b16 %v1485
    %v1753 = vunpack.c.h.b16 %v1485
    %v1754 = vunpack.c.l.b16 %v1486
    %v1755 = vunpack.c.h.b16 %v1486
    %v1756 = vunpack.c.l.b16 %v1487
    %v1757 = vunpack.c.h.b16 %v1487
    %v1758 = vunpack.c.l.b16 %v1488
    %v1759 = vunpack.c.h.b16 %v1488
    %v1760 = vunpack.c.l.b16 %v1489
    %v1761 = vunpack.c.h.b16 %v1489
    %v1762 = vunpack.c.l.b16 %v1490
    %v1763 = vunpack.c.h.b16 %v1490
    %v1764 = vunpack.c.l.b16 %v1491
    %v1765 = vunpack.c.h.b16 %v1491
    %v1766 = vunpack.c.l.b16 %v1492
    %v1767 = vunpack.c.h.b16 %v1492
    %v1768 = vunpack.c.l.b16 %v1493
    %v1769 = vunpack.c.h.b16 %v1493
    %v1770 = vunpack.c.l.b16 %v1494
    %v1771 = vunpack.c.h.b16 %v1494
    %v1772 = vunpack.c.l.b16 %v1495
    %v1773 = vunpack.c.h.b16 %v1495
    %v1774 = vunpack.c.l.b16 %v1496
    %v1775 = vunpack.c.h.b16 %v1496
    %v1776 = vunpack.c.l.b16 %v1497
    %v1777 = vunpack.c.h.b16 %v1497
    %v1778 = vunpack.c.l.b16 %v1498
    %v1779 = vunpack.c.h.b16 %v1498
    %v1780 = vunpack.c.l.b16 %v1499
    %v1781 = vunpack.c.h.b16 %v1499
    %v1782 = vunpack.c.l.b16 %v1500
    %v1783 = vunpack.c.h.b16 %v1500
    %v1784 = vunpack.c.l.b16 %v1501
    %v1785 = vunpack.c.h.b16 %v1501
    %v1786 = vunpack.c.l.b16 %v1502
    %v1787 = vunpack.c.h.b16 %v1502
    %v1788 = vunpack.c.l.b16 %v1503
    %v1789 = vunpack.c.h.b16 %v1503
    %v1790 = vunpack.c.l.b16 %v1504
    %v1791 = vunpack.c.h.b16 %v1504
    %v1792 = vunpack.c.l.b16 %v1505
    %v1793 = vunpack.c.h.b16 %v1505
    %v1794 = vunpack.c.l.b16 %v1506
    %v1795 = vunpack.c.h.b16 %v1506
    %v1796 = vunpack.c.l.b16 %v1507
    %v1797 = vunpack.c.h.b16 %v1507
    %v1798 = vunpack.c.l.b16 %v1508
    %v1799 = vunpack.c.h.b16 %v1508
    %v1800 = vunpack.c.l.b16 %v1509
    %v1801 = vunpack.c.h.b16 %v1509
    %v1802 = vunpack.c.l.b16 %v1510
    %v1803 = vunpack.c.h.b16 %v1510
    %v1804 = vunpack.c.l.b16 %v1511
    %v1805 = vunpack.c.h.b16 %v1511
    %v1806 = vunpack.c.l.b16 %v1512
    %v1807 = vunpack.c.h.b16 %v1512
    %v1808 = vunpack.c.l.b16 %v1513
    %v1809 = vunpack.c.h.b16 %v1513
    %v1810 = vunpack.c.l.b16 %v1514
    %v1811 = vunpack.c.h.b16 %v1514
    %v1812 = vunpack.c.l.b16 %v1515
    %v1813 = vunpack.c.h.b16 %v1515
    %v1814 = vunpack.c.l.b16 %v1516
    %v1815 = vunpack.c.h.b16 %v1516
    %v1816 = vunpack.c.l.b16 %v1517
    %v1817 = vunpack.c.h.b16 %v1517
    %v1818 = vunpack.c.l.b16 %v1518
    %v1819 = vunpack.c.h.b16 %v1518
    %v1820 = vunpack.c.l.b16 %v1519
    %v1821 = vunpack.c.h.b16 %v1519
    %v1822 = vunpack.c.l.b16 %v1520
    %v1823 = vunpack.c.h.b16 %v1520
    %v1824 = vunpack.c.l.b16 %v1521
    %v1825 = vunpack.c.h.b16 %v1521
    %v1826 = vunpack.c.l.b16 %v1522
    %v1827 = vunpack.c.h.b16 %v1522
    %v1828 = vunpack.c.l.b16 %v1523
    %v1829 = vunpack.c.h.b16 %v1523
    %v1830 = vunpack.c.l.b16 %v1524
    %v1831 = vunpack.c.h.b16 %v1524
    %v1832 = vunpack.c.l.b16 %v1525
    %v1833 = vunpack.c.h.b16 %v1525
    %v1834 = vunpack.c.l.b16 %v1526
    %v1835 = vunpack.c.h.b16 %v1526
    %v1836 = vunpack.c.l.b16 %v1527
    %v1837 = vunpack.c.h.b16 %v1527
    %v1838 = vunpack.c.l.b16 %v1528
    %v1839 = vunpack.c.h.b16 %v1528
    %v1840 = vunpack.c.l.b16 %v1529
    %v1841 = vunpack.c.h.b16 %v1529
    %v1842 = vunpack.c.l.b16 %v1530
    %v1843 = vunpack.c.h.b16 %v1530
    %v1844 = vunpack.c.l.b16 %v1531
    %v1845 = vunpack.c.h.b16 %v1531
    %v1846 = vunpack.c.l.b16 %v1532
    %v1847 = vunpack.c.h.b16 %v1532
    %v1848 = vunpack.c.l.b16 %v1533
    %v1849 = vunpack.c.h.b16 %v1533
    %v1850 = vunpack.c.l.b16 %v1534
    %v1851 = vunpack.c.h.b16 %v1534
    %v1852 = vunpack.c.l.b16 %v1535
    %v1853 = vunpack.c.h.b16 %v1535
    %v1854 = vunpack.c.l.b16 %v1536
    %v1855 = vunpack.c.h.b16 %v1536
    %v1856 = vunpack.c.l.b16 %v1537
    %v1857 = vunpack.c.h.b16 %v1537
    %v1858 = vunpack.c.l.b16 %v1538
    %v1859 = vunpack.c.h.b16 %v1538
    %v1860 = vunpack.c.l.b16 %v1539
    %v1861 = vunpack.c.h.b16 %v1539
    %v1862 = vunpack.c.l.b16 %v1540
    %v1863 = vunpack.c.h.b16 %v1540
    %v1864 = vunpack.c.l.b16 %v1541
    %v1865 = vunpack.c.h.b16 %v1541
    %v1866 = vunpack.c.l.b16 %v1542
    %v1867 = vunpack.c.h.b16 %v1542
    %v1868 = vunpack.c.l.b16 %v1543
    %v1869 = vunpack.c.h.b16 %v1543
    %v1870 = vunpack.c.l.b16 %v1544
    %v1871 = vunpack.c.h.b16 %v1544
    %v1872 = vunpack.c.l.b16 %v1545
    %v1873 = vunpack.c.h.b16 %v1545
    %v1874 = vunpack.c.l.b16 %v1546
    %v1875 = vunpack.c.h.b16 %v1546
    %v1876 = vunpack.c.l.b16 %v1547
    %v1877 = vunpack.c.h.b16 %v1547
    %v1878 = vunpack.c.l.b16 %v1548
    %v1879 = vunpack.c.h.b16 %v1548
    %v1880 = vunpack.c.l.b16 %v1549
    %v1881 = vunpack.c.h.b16 %v1549
    %v1882 = vunpack.c.l.b16 %v1550
    %v1883 = vunpack.c.h.b16 %v1550
    %v1884 = vunpack.c.l.b16 %v1551
    %v1885 = vunpack.c.h.b16 %v1551
    %v1886 = vunpack.c.l.b16 %v1552
    %v1887 = vunpack.c.h.b16 %v1552
    %v1888 = vunpack.c.l.b16 %v1553
    %v1889 = vunpack.c.h.b16 %v1553
    %v1890 = vunpack.c.l.b16 %v1554
    %v1891 = vunpack.c.h.b16 %v1554
    %v1892 = vunpack.c.l.b16 %v1555
    %v1893 = vunpack.c.h.b16 %v1555
    %v1894 = vunpack.c.l.b16 %v1556
    %v1895 = vunpack.c.h.b16 %v1556
    %v1896 = vunpack.c.l.b16 %v1557
    %v1897 = vunpack.c.h.b16 %v1557
    %v1898 = vunpack.c.l.b16 %v1558
    %v1899 = vunpack.c.h.b16 %v1558
    %v1900 = vunpack.c.l.b16 %v1559
    %v1901 = vunpack.c.h.b16 %v1559
    %v1902 = vunpack.c.l.b16 %v1560
    %v1903 = vunpack.c.h.b16 %v1560
    %v1904 = vunpack.c.l.b16 %v1561
    %v1905 = vunpack.c.h.b16 %v1561
    %v1906 = vunpack.c.l.b16 %v1562
    %v1907 = vunpack.c.h.b16 %v1562
    %v1908 = vunpack.c.l.b16 %v1563
    %v1909 = vunpack.c.h.b16 %v1563
    %v1910 = vunpack.c.l.b16 %v1564
    %v1911 = vunpack.c.h.b16 %v1564
    %v1912 = vunpack.c.l.b16 %v1565
    %v1913 = vunpack.c.h.b16 %v1565
    %v1914 = vunpack.c.l.b16 %v1566
    %v1915 = vunpack.c.h.b16 %v1566
    %v1916 = vunpack.c.l.b16 %v1567
    %v1917 = vunpack.c.h.b16 %v1567
    %v1918 = vunpack.c.l.b16 %v1568
    %v1919 = vunpack.c.h.b16 %v1568
    %v1920 = vunpack.c.l.b16 %v1569
    %v1921 = vunpack.c.h.b16 %v1569
    %v1922 = vunpack.c.l.b16 %v1570
    %v1923 = vunpack.c.h.b16 %v1570
    %v1924 = vunpack.c.l.b16 %v1571
    %v1925 = vunpack.c.h.b16 %v1571
    %v1926 = vunpack.c.l.b16 %v1572
    %v1927 = vunpack.c.h.b16 %v1572
    %v1928 = vunpack.c.l.b16 %v1573
    %v1929 = vunpack.c.h.b16 %v1573
    %v1930 = vunpack.c.l.b16 %v1574
    %v1931 = vunpack.c.h.b16 %v1574
    %v1932 = vunpack.c.l.b16 %v1575
    %v1933 = vunpack.c.h.b16 %v1575
    %v1934 = vunpack.c.l.b16 %v1576
    %v1935 = vunpack.c.h.b16 %v1576
    %v1936 = vunpack.c.l.b16 %v1577
    %v1937 = vunpack.c.h.b16 %v1577
    %v1938 = vunpack.c.l.b16 %v1578
    %v1939 = vunpack.c.h.b16 %v1578
    %v1940 = vunpack.c.l.b16 %v1579
    %v1941 = vunpack.c.h.b16 %v1579
    %v1942 = vunpack.c.l.b16 %v1580
    %v1943 = vunpack.c.h.b16 %v1580
    %v1944 = vunpack.c.l.b16 %v1581
    %v1945 = vunpack.c.h.b16 %v1581
    %v1946 = vunpack.c.l.b16 %v1582
    %v1947 = vunpack.c.h.b16 %v1582
    %v1948 = vunpack.c.l.b16 %v1583
    %v1949 = vunpack.c.h.b16 %v1583
    %v1950 = vunpack.c.l.b16 %v1584
    %v1951 = vunpack.c.h.b16 %v1584
    %v1952 = vunpack.c.l.b16 %v1585
    %v1953 = vunpack.c.h.b16 %v1585
    %v1954 = vunpack.c.l.b16 %v1586
    %v1955 = vunpack.c.h.b16 %v1586
    %v1956 = vunpack.c.l.b16 %v1587
    %v1957 = vunpack.c.h.b16 %v1587
    %v1958 = vunpack.c.l.b16 %v1588
    %v1959 = vunpack.c.h.b16 %v1588
    %v1960 = vunpack.c.l.b16 %v1589
    %v1961 = vunpack.c.h.b16 %v1589
    %v1962 = vunpack.c.l.b16 %v1590
    %v1963 = vunpack.c.h.b16 %v1590
    %v1964 = vunpack.c.l.b16 %v1591
    %v1965 = vunpack.c.h.b16 %v1591
    %v1966 = vunpack.c.l.b16 %v1592
    %v1967 = vunpack.c.h.b16 %v1592
    %v1968 = vunpack.c.l.b16 %v1593
    %v1969 = vunpack.c.h.b16 %v1593
    %v1970 = vunpack.c.l.b16 %v1594
    %v1971 = vunpack.c.h.b16 %v1594
    %v1972 = vunpack.c.l.b16 %v1595
    %v1973 = vunpack.c.h.b16 %v1595
    %v1974 = vunpack.c.l.b16 %v1596
    %v1975 = vunpack.c.h.b16 %v1596
    %v1976 = vunpack.c.l.b16 %v1597
    %v1977 = vunpack.c.h.b16 %v1597
    %v1978 = vunpack.c.l.b16 %v1598
    %v1979 = vunpack.c.h.b16 %v1598
    %v1980 = vunpack.c.l.b16 %v1599
    %v1981 = vunpack.c.h.b16 %v1599
    %v1982 = vunpack.c.l.b16 %v1600
    %v1983 = vunpack.c.h.b16 %v1600
    %v1984 = vunpack.c.l.b16 %v1601
    %v1985 = vunpack.c.h.b16 %v1601
    %v1986 = vpack.c.b16 %v1734, %v1730
    %v1987 = vpack.c.b16 %v1735, %v1731
    %v1988 = vpack.c.b16 %v1736, %v1732
    %v1989 = vpack.c.b16 %v1737, %v1733
    %v1990 = vpack.c.b16 %v1742, %v1738
    %v1991 = vpack.c.b16 %v1743, %v1739
    %v1992 = vpack.c.b16 %v1744, %v1740
    %v1993 = vpack.c.b16 %v1745, %v1741
    %v1994 = vpack.c.b16 %v1750, %v1746
    %v1995 = vpack.c.b16 %v1751, %v1747
    %v1996 = vpack.c.b16 %v1752, %v1748
    %v1997 = vpack.c.b16 %v1753, %v1749
    %v1998 = vpack.c.b16 %v1758, %v1754
    %v1999 = vpack.c.b16 %v1759, %v1755
    %v2000 = vpack.c.b16 %v1760, %v1756
    %v2001 = vpack.c.b16 %v1761, %v1757
    %v2002 = vpack.c.b16 %v1766, %v1762
    %v2003 = vpack.c.b16 %v1767, %v1763
    %v2004 = vpack.c.b16 %v1768, %v1764
    %v2005 = vpack.c.b16 %v1769, %v1765
    %v2006 = vpack.c.b16 %v1774, %v1770
    %v2007 = vpack.c.b16 %v1775, %v1771
    %v2008 = vpack.c.b16 %v1776, %v1772
    %v2009 = vpack.c.b16 %v1777, %v1773
    %v2010 = vpack.c.b16 %v1782, %v1778
    %v2011 = vpack.c.b16 %v1783, %v1779
    %v2012 = vpack.c.b16 %v1784, %v1780
    %v2013 = vpack.c.b16 %v1785, %v1781
    %v2014 = vpack.c.b16 %v1790, %v1786
    %v2015 = vpack.c.b16 %v1791, %v1787
    %v2016 = vpack.c.b16 %v1792, %v1788
    %v2017 = vpack.c.b16 %v1793, %v1789
    %v2018 = vpack.c.b16 %v1798, %v1794
    %v2019 = vpack.c.b16 %v1799, %v1795
    %v2020 = vpack.c.b16 %v1800, %v1796
    %v2021 = vpack.c.b16 %v1801, %v1797
    %v2022 = vpack.c.b16 %v1806, %v1802
    %v2023 = vpack.c.b16 %v1807, %v1803
    %v2024 = vpack.c.b16 %v1808, %v1804
    %v2025 = vpack.c.b16 %v1809, %v1805
    %v2026 = vpack.c.b16 %v1814, %v1810
    %v2027 = vpack.c.b16 %v1815, %v1811
    %v2028 = vpack.c.b16 %v1816, %v1812
    %v2029 = vpack.c.b16 %v1817, %v1813
    %v2030 = vpack.c.b16 %v1822, %v1818
    %v2031 = vpack.c.b16 %v1823, %v1819
    %v2032 = vpack.c.b16 %v1824, %v1820
    %v2033 = vpack.c.b16 %v1825, %v1821
    %v2034 = vpack.c.b16 %v1830, %v1826
    %v2035 = vpack.c.b16 %v1831, %v1827
    %v2036 = vpack.c.b16 %v1832, %v1828
    %v2037 = vpack.c.b16 %v1833, %v1829
    %v2038 = vpack.c.b16 %v1838, %v1834
    %v2039 = vpack.c.b16 %v1839, %v1835
    %v2040 = vpack.c.b16 %v1840, %v1836
    %v2041 = vpack.c.b16 %v1841, %v1837
    %v2042 = vpack.c.b16 %v1846, %v1842
    %v2043 = vpack.c.b16 %v1847, %v1843
    %v2044 = vpack.c.b16 %v1848, %v1844
    %v2045 = vpack.c.b16 %v1849, %v1845
    %v2046 = vpack.c.b16 %v1854, %v1850
    %v2047 = vpack.c.b16 %v1855, %v1851
    %v2048 = vpack.c.b16 %v1856, %v1852
    %v2049 = vpack.c.b16 %v1857, %v1853
    %v2050 = vpack.c.b16 %v1862, %v1858
    %v2051 = vpack.c.b16 %v1863, %v1859
    %v2052 = vpack.c.b16 %v1864, %v1860
    %v2053 = vpack.c.b16 %v1865, %v1861
    %v2054 = vpack.c.b16 %v1870, %v1866
    %v2055 = vpack.c.b16 %v1871, %v1867
    %v2056 = vpack.c.b16 %v1872, %v1868
    %v2057 = vpack.c.b16 %v1873, %v1869
    %v2058 = vpack.c.b16 %v1878, %v1874
    %v2059 = vpack.c.b16 %v1879, %v1875
    %v2060 = vpack.c.b16 %v1880, %v1876
    %v2061 = vpack.c.b16 %v1881, %v1877
    %v2062 = vpack.c.b16 %v1886, %v1882
    %v2063 = vpack.c.b16 %v1887, %v1883
    %v2064 = vpack.c.b16 %v1888, %v1884
    %v2065 = vpack.c.b16 %v1889, %v1885
    %v2066 = vpack.c.b16 %v1894, %v1890
    %v2067 = vpack.c.b16 %v1895, %v1891
    %v2068 = vpack.c.b16 %v1896, %v1892
    %v2069 = vpack.c.b16 %v1897, %v1893
    %v2070 = vpack.c.b16 %v1902, %v1898
    %v2071 = vpack.c.b16 %v1903, %v1899
    %v2072 = vpack.c.b16 %v1904, %v1900
    %v2073 = vpack.c.b16 %v1905, %v1901
    %v2074 = vpack.c.b16 %v1910, %v1906
    %v2075 = vpack.c.b16 %v1911, %v1907
    %v2076 = vpack.c.b16 %v1912, %v1908
    %v2077 = vpack.c.b16 %v1913, %v1909
    %v2078 = vpack.c.b16 %v1918, %v1914
    %v2079 = vpack.c.b16 %v1919, %v1915
    %v2080 = vpack.c.b16 %v1920, %v1916
    %v2081 = vpack.c.b16 %v1921, %v1917
    %v2082 = vpack.c.b16 %v1926, %v1922
    %v2083 = vpack.c.b16 %v1927, %v1923
    %v2084 = vpack.c.b16 %v1928, %v1924
    %v2085 = vpack.c.b16 %v1929, %v1925
    %v2086 = vpack.c.b16 %v1934, %v1930
    %v2087 = vpack.c.b16 %v1935, %v1931
    %v2088 = vpack.c.b16 %v1936, %v1932
    %v2089 = vpack.c.b16 %v1937, %v1933
    %v2090 = vpack.c.b16 %v1942, %v1938
    %v2091 = vpack.c.b16 %v1943, %v1939
    %v2092 = vpack.c.b16 %v1944, %v1940
    %v2093 = vpack.c.b16 %v1945, %v1941
    %v2094 = vpack.c.b16 %v1950, %v1946
    %v2095 = vpack.c.b16 %v1951, %v1947
    %v2096 = vpack.c.b16 %v1952, %v1948
    %v2097 = vpack.c.b16 %v1953, %v1949
    %v2098 = vpack.c.b16 %v1958, %v1954
    %v2099 = vpack.c.b16 %v1959, %v1955
    %v2100 = vpack.c.b16 %v1960, %v1956
    %v2101 = vpack.c.b16 %v1961, %v1957
    %v2102 = vpack.c.b16 %v1966, %v1962
    %v2103 = vpack.c.b16 %v1967, %v1963
    %v2104 = vpack.c.b16 %v1968, %v1964
    %v2105 = vpack.c.b16 %v1969, %v1965
    %v2106 = vpack.c.b16 %v1974, %v1970
    %v2107 = vpack.c.b16 %v1975, %v1971
    %v2108 = vpack.c.b16 %v1976, %v1972
    %v2109 = vpack.c.b16 %v1977, %v1973
    %v2110 = vpack.c.b16 %v1982, %v1978
    %v2111 = vpack.c.b16 %v1983, %v1979
    %v2112 = vpack.c.b16 %v1984, %v1980
    %v2113 = vpack.c.b16 %v1985, %v1981
    %2242 = vmatprep.subr.bf16.mxu0 %v1987
    %2243 = vmatpush1.bf16.msra.mxu0 %v1986
    %2244 = vmatprep.subr.bf16.mxu0 %v1991
    %2245 = vmatpush1.bf16.msra.mxu0 %v1990
    %2246 = vmatprep.subr.bf16.mxu0 %v1995
    %2247 = vmatpush1.bf16.msra.mxu0 %v1994
    %2248 = vmatprep.subr.bf16.mxu0 %v1999
    %2249 = vmatpush1.bf16.msra.mxu0 %v1998
    %2250 = vmatprep.subr.bf16.mxu0 %v2003
    %2251 = vmatpush1.bf16.msra.mxu0 %v2002
    %2252 = vmatprep.subr.bf16.mxu0 %v2007
    %2253 = vmatpush1.bf16.msra.mxu0 %v2006
    %2254 = vmatprep.subr.bf16.mxu0 %v2011
    %2255 = vmatpush1.bf16.msra.mxu0 %v2010
    %2256 = vmatprep.subr.bf16.mxu0 %v2015
    %2257 = vmatpush1.bf16.msra.mxu0 %v2014
    %2258 = vmatprep.subr.bf16.mxu0 %v2019
    %2259 = vmatpush1.bf16.msra.mxu0 %v2018
    %2260 = vmatprep.subr.bf16.mxu0 %v2023
    %2261 = vmatpush1.bf16.msra.mxu0 %v2022
    %2262 = vmatprep.subr.bf16.mxu0 %v2027
    %2263 = vmatpush1.bf16.msra.mxu0 %v2026
    %2264 = vmatprep.subr.bf16.mxu0 %v2031
    %2265 = vmatpush1.bf16.msra.mxu0 %v2030
    %2266 = vmatprep.subr.bf16.mxu0 %v2035
    %2267 = vmatpush1.bf16.msra.mxu0 %v2034
    %2268 = vmatprep.subr.bf16.mxu0 %v2039
    %2269 = vmatpush1.bf16.msra.mxu0 %v2038
    %2270 = vmatprep.subr.bf16.mxu0 %v2043
    %2271 = vmatpush1.bf16.msra.mxu0 %v2042
    %2272 = vmatprep.subr.bf16.mxu0 %v2047
    %2273 = vmatpush1.bf16.msra.mxu0 %v2046
    %2274 = vmatprep.mubr.bf16.mxu0 %v1463
    %2275 = vmatmul.mubr.bf16.gmra.mrb[0].mxu0 %v1462
    %v2276 = vpop.f32.mrb[0].mxu0
    %v2277 = vadd.f32 0.0, %v2276
    %v2278 = vpop.f32.mrb[0].mxu0
    %v2279 = vadd.f32 0.0, %v2278
    %v2280 = vpop.f32.mrb[0].mxu0
    %v2281 = vadd.f32 0.0, %v2280
    %v2282 = vpop.f32.mrb[0].mxu0
    %v2283 = vadd.f32 0.0, %v2282
    %2284 = vmatprep.mubr.bf16.mxu0 %v1467
    %2285 = vmatmul.mubr.bf16.gmra.mrb[0].mxu0 %v1466
    %v2286 = vpop.f32.mrb[0].mxu0
    %v2287 = vadd.f32 0.0, %v2286
    %v2288 = vpop.f32.mrb[0].mxu0
    %v2289 = vadd.f32 0.0, %v2288
    %v2290 = vpop.f32.mrb[0].mxu0
    %v2291 = vadd.f32 0.0, %v2290
    %v2292 = vpop.f32.mrb[0].mxu0
    %v2293 = vadd.f32 0.0, %v2292
    %2294 = vmatprep.mubr.bf16.mxu0 %v1471
    %2295 = vmatmul.mubr.bf16.gmra.mrb[0].mxu0 %v1470
    %v2296 = vpop.f32.mrb[0].mxu0
    %v2297 = vadd.f32 0.0, %v2296
    %v2298 = vpop.f32.mrb[0].mxu0
    %v2299 = vadd.f32 0.0, %v2298
    %v2300 = vpop.f32.mrb[0].mxu0
    %v2301 = vadd.f32 0.0, %v2300
    %v2302 = vpop.f32.mrb[0].mxu0
    %v2303 = vadd.f32 0.0, %v2302
    %2304 = vdwg.mxu0
    %2305 = vmatprep.subr.bf16.mxu0 %v2051
    %2306 = vmatpush1.bf16.msra.mxu0 %v2050
    %2307 = vmatprep.subr.bf16.mxu0 %v2055
    %2308 = vmatpush1.bf16.msra.mxu0 %v2054
    %2309 = vmatprep.subr.bf16.mxu0 %v2059
    %2310 = vmatpush1.bf16.msra.mxu0 %v2058
    %2311 = vmatprep.subr.bf16.mxu0 %v2063
    %2312 = vmatpush1.bf16.msra.mxu0 %v2062
    %2313 = vmatprep.subr.bf16.mxu0 %v2067
    %2314 = vmatpush1.bf16.msra.mxu0 %v2066
    %2315 = vmatprep.subr.bf16.mxu0 %v2071
    %2316 = vmatpush1.bf16.msra.mxu0 %v2070
    %2317 = vmatprep.subr.bf16.mxu0 %v2075
    %2318 = vmatpush1.bf16.msra.mxu0 %v2074
    %2319 = vmatprep.subr.bf16.mxu0 %v2079
    %2320 = vmatpush1.bf16.msra.mxu0 %v2078
    %2321 = vmatprep.subr.bf16.mxu0 %v2083
    %2322 = vmatpush1.bf16.msra.mxu0 %v2082
    %2323 = vmatprep.subr.bf16.mxu0 %v2087
    %2324 = vmatpush1.bf16.msra.mxu0 %v2086
    %2325 = vmatprep.subr.bf16.mxu0 %v2091
    %2326 = vmatpush1.bf16.msra.mxu0 %v2090
    %2327 = vmatprep.subr.bf16.mxu0 %v2095
    %2328 = vmatpush1.bf16.msra.mxu0 %v2094
    %2329 = vmatprep.subr.bf16.mxu0 %v2099
    %2330 = vmatpush1.bf16.msra.mxu0 %v2098
    %2331 = vmatprep.subr.bf16.mxu0 %v2103
    %2332 = vmatpush1.bf16.msra.mxu0 %v2102
    %2333 = vmatprep.subr.bf16.mxu0 %v2107
    %2334 = vmatpush1.bf16.msra.mxu0 %v2106
    %2335 = vmatprep.subr.bf16.mxu0 %v2111
    %2336 = vmatpush1.bf16.msra.mxu0 %v2110
    %2337 = vmatprep.mubr.bf16.mxu0 %v1465
    %2338 = vmatmul.mubr.bf16.gmra.mrb[0].mxu0 %v1464
    %v2339 = vpop.f32.mrb[0].mxu0
    %v2340 = vadd.f32 %v2277, %v2339
    %v2341 = vpop.f32.mrb[0].mxu0
    %v2342 = vadd.f32 %v2279, %v2341
    %v2343 = vpop.f32.mrb[0].mxu0
    %v2344 = vadd.f32 %v2281, %v2343
    %v2345 = vpop.f32.mrb[0].mxu0
    %v2346 = vadd.f32 %v2283, %v2345
    %2347 = vmatprep.mubr.bf16.mxu0 %v1469
    %2348 = vmatmul.mubr.bf16.gmra.mrb[0].mxu0 %v1468
    %v2349 = vpop.f32.mrb[0].mxu0
    %v2350 = vadd.f32 %v2287, %v2349
    %v2351 = vpop.f32.mrb[0].mxu0
    %v2352 = vadd.f32 %v2289, %v2351
    %v2353 = vpop.f32.mrb[0].mxu0
    %v2354 = vadd.f32 %v2291, %v2353
    %v2355 = vpop.f32.mrb[0].mxu0
    %v2356 = vadd.f32 %v2293, %v2355
    %2357 = vmatprep.mubr.bf16.mxu0 %v1473
    %2358 = vmatmul.mubr.bf16.gmra.mrb[0].mxu0 %v1472
    %v2359 = vpop.f32.mrb[0].mxu0
    %v2360 = vadd.f32 %v2297, %v2359
    %v2361 = vpop.f32.mrb[0].mxu0
    %v2362 = vadd.f32 %v2299, %v2361
    %v2363 = vpop.f32.mrb[0].mxu0
    %v2364 = vadd.f32 %v2301, %v2363
    %v2365 = vpop.f32.mrb[0].mxu0
    %v2366 = vadd.f32 %v2303, %v2365
    %2367 = vdwg.mxu0
    %2368 = vmatprep.subr.bf16.mxu0 %v1989
    %2369 = vmatpush1.bf16.msra.mxu0 %v1988
    %2370 = vmatprep.subr.bf16.mxu0 %v1993
    %2371 = vmatpush1.bf16.msra.mxu0 %v1992
    %2372 = vmatprep.subr.bf16.mxu0 %v1997
    %2373 = vmatpush1.bf16.msra.mxu0 %v1996
    %2374 = vmatprep.subr.bf16.mxu0 %v2001
    %2375 = vmatpush1.bf16.msra.mxu0 %v2000
    %2376 = vmatprep.subr.bf16.mxu0 %v2005
    %2377 = vmatpush1.bf16.msra.mxu0 %v2004
    %2378 = vmatprep.subr.bf16.mxu0 %v2009
    %2379 = vmatpush1.bf16.msra.mxu0 %v2008
    %2380 = vmatprep.subr.bf16.mxu0 %v2013
    %2381 = vmatpush1.bf16.msra.mxu0 %v2012
    %2382 = vmatprep.subr.bf16.mxu0 %v2017
    %2383 = vmatpush1.bf16.msra.mxu0 %v2016
    %2384 = vmatprep.subr.bf16.mxu0 %v2021
    %2385 = vmatpush1.bf16.msra.mxu0 %v2020
    %2386 = vmatprep.subr.bf16.mxu0 %v2025
    %2387 = vmatpush1.bf16.msra.mxu0 %v2024
    %2388 = vmatprep.subr.bf16.mxu0 %v2029
    %2389 = vmatpush1.bf16.msra.mxu0 %v2028
    %2390 = vmatprep.subr.bf16.mxu0 %v2033
    %2391 = vmatpush1.bf16.msra.mxu0 %v2032
    %2392 = vmatprep.subr.bf16.mxu0 %v2037
    %2393 = vmatpush1.bf16.msra.mxu0 %v2036
    %2394 = vmatprep.subr.bf16.mxu0 %v2041
    %2395 = vmatpush1.bf16.msra.mxu0 %v2040
    %2396 = vmatprep.subr.bf16.mxu0 %v2045
    %2397 = vmatpush1.bf16.msra.mxu0 %v2044
    %2398 = vmatprep.subr.bf16.mxu0 %v2049
    %2399 = vmatpush1.bf16.msra.mxu0 %v2048
    %2400 = vmatprep.mubr.bf16.mxu0 %v1463
    %2401 = vmatmul.mubr.bf16.gmra.mrb[0].mxu0 %v1462
    %v2402 = vpop.f32.mrb[0].mxu0
    %v2403 = vadd.f32 0.0, %v2402
    %v2404 = vpop.f32.mrb[0].mxu0
    %v2405 = vadd.f32 0.0, %v2404
    %v2406 = vpop.f32.mrb[0].mxu0
    %v2407 = vadd.f32 0.0, %v2406
    %v2408 = vpop.f32.mrb[0].mxu0
    %v2409 = vadd.f32 0.0, %v2408
    %2410 = vmatprep.mubr.bf16.mxu0 %v1467
    %2411 = vmatmul.mubr.bf16.gmra.mrb[0].mxu0 %v1466
    %v2412 = vpop.f32.mrb[0].mxu0
    %v2413 = vadd.f32 0.0, %v2412
    %v2414 = vpop.f32.mrb[0].mxu0
    %v2415 = vadd.f32 0.0, %v2414
    %v2416 = vpop.f32.mrb[0].mxu0
    %v2417 = vadd.f32 0.0, %v2416
    %v2418 = vpop.f32.mrb[0].mxu0
    %v2419 = vadd.f32 0.0, %v2418
    %2420 = vmatprep.mubr.bf16.mxu0 %v1471
    %2421 = vmatmul.mubr.bf16.gmra.mrb[0].mxu0 %v1470
    %v2422 = vpop.f32.mrb[0].mxu0
    %v2423 = vadd.f32 0.0, %v2422
    %v2424 = vpop.f32.mrb[0].mxu0
    %v2425 = vadd.f32 0.0, %v2424
    %v2426 = vpop.f32.mrb[0].mxu0
    %v2427 = vadd.f32 0.0, %v2426
    %v2428 = vpop.f32.mrb[0].mxu0
    %v2429 = vadd.f32 0.0, %v2428
    %2430 = vdwg.mxu0
    %2431 = vmatprep.subr.bf16.mxu0 %v2053
    %2432 = vmatpush1.bf16.msra.mxu0 %v2052
    %2433 = vmatprep.subr.bf16.mxu0 %v2057
    %2434 = vmatpush1.bf16.msra.mxu0 %v2056
    %2435 = vmatprep.subr.bf16.mxu0 %v2061
    %2436 = vmatpush1.bf16.msra.mxu0 %v2060
    %2437 = vmatprep.subr.bf16.mxu0 %v2065
    %2438 = vmatpush1.bf16.msra.mxu0 %v2064
    %2439 = vmatprep.subr.bf16.mxu0 %v2069
    %2440 = vmatpush1.bf16.msra.mxu0 %v2068
    %2441 = vmatprep.subr.bf16.mxu0 %v2073
    %2442 = vmatpush1.bf16.msra.mxu0 %v2072
    %2443 = vmatprep.subr.bf16.mxu0 %v2077
    %2444 = vmatpush1.bf16.msra.mxu0 %v2076
    %2445 = vmatprep.subr.bf16.mxu0 %v2081
    %2446 = vmatpush1.bf16.msra.mxu0 %v2080
    %2447 = vmatprep.subr.bf16.mxu0 %v2085
    %2448 = vmatpush1.bf16.msra.mxu0 %v2084
    %2449 = vmatprep.subr.bf16.mxu0 %v2089
    %2450 = vmatpush1.bf16.msra.mxu0 %v2088
    %2451 = vmatprep.subr.bf16.mxu0 %v2093
    %2452 = vmatpush1.bf16.msra.mxu0 %v2092
    %2453 = vmatprep.subr.bf16.mxu0 %v2097
    %2454 = vmatpush1.bf16.msra.mxu0 %v2096
    %2455 = vmatprep.subr.bf16.mxu0 %v2101
    %2456 = vmatpush1.bf16.msra.mxu0 %v2100
    %2457 = vmatprep.subr.bf16.mxu0 %v2105
    %2458 = vmatpush1.bf16.msra.mxu0 %v2104
    %2459 = vmatprep.subr.bf16.mxu0 %v2109
    %2460 = vmatpush1.bf16.msra.mxu0 %v2108
    %2461 = vmatprep.subr.bf16.mxu0 %v2113
    %2462 = vmatpush1.bf16.msra.mxu0 %v2112
    %2463 = vmatprep.mubr.bf16.mxu0 %v1465
    %2464 = vmatmul.mubr.bf16.gmra.mrb[0].mxu0 %v1464
    %v2465 = vpop.f32.mrb[0].mxu0
    %v2466 = vadd.f32 %v2403, %v2465
    %v2467 = vpop.f32.mrb[0].mxu0
    %v2468 = vadd.f32 %v2405, %v2467
    %v2469 = vpop.f32.mrb[0].mxu0
    %v2470 = vadd.f32 %v2407, %v2469
    %v2471 = vpop.f32.mrb[0].mxu0
    %v2472 = vadd.f32 %v2409, %v2471
    %2473 = vmatprep.mubr.bf16.mxu0 %v1469
    %2474 = vmatmul.mubr.bf16.gmra.mrb[0].mxu0 %v1468
    %v2475 = vpop.f32.mrb[0].mxu0
    %v2476 = vadd.f32 %v2413, %v2475
    %v2477 = vpop.f32.mrb[0].mxu0
    %v2478 = vadd.f32 %v2415, %v2477
    %v2479 = vpop.f32.mrb[0].mxu0
    %v2480 = vadd.f32 %v2417, %v2479
    %v2481 = vpop.f32.mrb[0].mxu0
    %v2482 = vadd.f32 %v2419, %v2481
    %2483 = vmatprep.mubr.bf16.mxu0 %v1473
    %2484 = vmatmul.mubr.bf16.gmra.mrb[0].mxu0 %v1472
    %v2485 = vpop.f32.mrb[0].mxu0
    %v2486 = vadd.f32 %v2423, %v2485
    %v2487 = vpop.f32.mrb[0].mxu0
    %v2488 = vadd.f32 %v2425, %v2487
    %v2489 = vpop.f32.mrb[0].mxu0
    %v2490 = vadd.f32 %v2427, %v2489
    %v2491 = vpop.f32.mrb[0].mxu0
    %v2492 = vadd.f32 %v2429, %v2491
    %2493 = vdwg.mxu0
    %v2494 = vld [vmem:[#allocation9] sm:$0xff]
    %v2495 = vld [vmem:[#allocation9 + $0x8] sm:$0xff]
    %v2496 = vld [vmem:[#allocation9 + $0x10] sm:$0xff]
    %vm2500 = vcmask 1040384
    %v2501 = vrot.slane %v2342, 7
    %v2502 = vrot.slane %v2346, 7
    %v2503 = vsel %vm2500, %v2501, %v2502
    %v2504 = vrot.slane %v2352, 7
    %v2505 = vsel %vm2500, %v2502, %v2504
    %v2509 = vsel %vm2500, 0.0, %v2501
    %v2510 = vadd.f32 %v2340, %v2509
    %v2511 = vadd.f32 %v2344, %v2503
    %v2512 = vadd.f32 %v2350, %v2505
    %vm2516 = vcmask 1041408
    %v2517 = vrot.slane %v2466, 6
    %v2518 = vrot.slane %v2470, 6
    %v2519 = vsel %vm2516, %v2517, %v2518
    %v2520 = vrot.slane %v2476, 6
    %v2521 = vsel %vm2516, %v2518, %v2520
    %v2525 = vsel %vm2516, 0.0, %v2517
    %v2526 = vadd.f32 %v2510, %v2525
    %v2527 = vadd.f32 %v2511, %v2519
    %v2528 = vadd.f32 %v2512, %v2521
    %vm2532 = vcmask 1042432
    %v2533 = vrot.slane %v2468, 5
    %v2534 = vrot.slane %v2472, 5
    %v2535 = vsel %vm2532, %v2533, %v2534
    %v2536 = vrot.slane %v2478, 5
    %v2537 = vsel %vm2532, %v2534, %v2536
    %v2541 = vsel %vm2532, 0.0, %v2533
    %v2542 = vadd.f32 %v2526, %v2541
    %v2543 = vadd.f32 %v2527, %v2535
    %v2544 = vadd.f32 %v2528, %v2537
    %v2545 = vmul.f32 %v2542, %v2494
    %v2546 = vmul.f32 %v2543, %v2495
    %v2547 = vmul.f32 %v2544, %v2496
    %2548 = vst [vmem:[#allocation11] sm:$0xff] %v2545
    %2549 = vst [vmem:[#allocation11 + $0x8] sm:$0xff] %v2546
    %2550 = vst [vmem:[#allocation11 + $0x10] sm:$0xff] %v2547
    %v2554 = vrot.slane %v2356, 7
    %v2555 = vrot.slane %v2362, 7
    %v2556 = vsel %vm2500, %v2554, %v2555
    %v2557 = vrot.slane %v2366, 7
    %v2558 = vsel %vm2500, %v2555, %v2557
    %v2562 = vsel %vm2500, 0.0, %v2554
    %v2563 = vadd.f32 %v2354, %v2562
    %v2564 = vadd.f32 %v2360, %v2556
    %v2565 = vadd.f32 %v2364, %v2558
    %v2569 = vrot.slane %v2480, 6
    %v2570 = vrot.slane %v2486, 6
    %v2571 = vsel %vm2516, %v2569, %v2570
    %v2572 = vrot.slane %v2490, 6
    %v2573 = vsel %vm2516, %v2570, %v2572
    %v2577 = vsel %vm2516, 0.0, %v2569
    %v2578 = vadd.f32 %v2563, %v2577
    %v2579 = vadd.f32 %v2564, %v2571
    %v2580 = vadd.f32 %v2565, %v2573
    %v2584 = vrot.slane %v2482, 5
    %v2585 = vrot.slane %v2488, 5
    %v2586 = vsel %vm2532, %v2584, %v2585
    %v2587 = vrot.slane %v2492, 5
    %v2588 = vsel %vm2532, %v2585, %v2587
    %v2592 = vsel %vm2532, 0.0, %v2584
    %v2593 = vadd.f32 %v2578, %v2592
    %v2594 = vadd.f32 %v2579, %v2586
    %v2595 = vadd.f32 %v2580, %v2588
    %v2596 = vmul.f32 %v2593, %v2494
    %v2597 = vmul.f32 %v2594, %v2495
    %v2598 = vmul.f32 %v2595, %v2496
    %s2599 = scalar_lea.vmem [#allocation11], 24
    %2600 = vst [vmem:[%s2599] sm:$0xff] %v2596
    %2601 = vst [vmem:[%s2599 + $0x8] sm:$0xff] %v2597
    %2602 = vst [vmem:[%s2599 + $0x10] sm:$0xff] %v2598
    // Predicated region
    $region42: #{tpu_custom_call.1} parent=1 // pred_check
      _
    $region43: #{tpu_custom_call.1} parent=1 // pred_check_branch
      %2604 = sbr.rel (0) target = $region45
    $region44: #{tpu_custom_call.1} parent=1 // pred_region
      %s2606 = ssub.s32 768, 768
      %2607 = vsyncadd [#allocation5], %s2606
      %s2608 = sshll.u32 [#allocation11], 4
      %s2609 = int_to_ptr.vmem [resolvable:$true] %s2608
      %2614 = dma.vmem_to_hbm [thread:$0]  %s2609, 768, %s6, [#allocation5], 128, 128, 8
    $region45: #{tpu_custom_call.1} parent=1 // pred_fallthru
      _
    // Predicated region
    $region46: #{tpu_custom_call.1} parent=1 // pred_check
      _
    $region47: #{tpu_custom_call.1} parent=1 // pred_check_branch
      %2616 = sbr.rel (0) target = $region49
    $region48: #{tpu_custom_call.1} parent=1 // pred_region
      %2617 = dma.done [#allocation5], 768
    $region49: #{tpu_custom_call.1} parent=1 // pred_fallthru
      _
    %2618 = vsyncpa [#allocation4], 1
    %2619 = vsyncpa [#allocation7], 1
    %2620 = vsyncpa [#allocation10], 1
    %2621 = vsyncpa [#allocation5], 1

</llo_original>
